<compile_context>
chip_gen: v5e
topology: v5e:2x2
jax: 0.10.0
libtpu: 0.0.40
codegen_flags: <defaults>
</compile_context>

<pallas_src>
import functools

import jax
import jax.numpy as jnp
from jax.experimental import pallas as pl
from jax.experimental.pallas import tpu as pltpu


# ----------------------------------------------------------------------------
# Fused Pallas kernel: 3x GCNConv(+ReLU) -> concat -> BatchNorm -> out_proj
# ----------------------------------------------------------------------------

def _fused_forward_kernel(x_ref, ea_ref, g_ref, s_ref, norm_ref, deginv_ref,
                          wlin_ref, blin_ref, wedge_ref, bedge_ref, root_ref,
                          gamma_ref, beta_ref, wout_ref, bout_ref,
                          o_ref, xcat_ref, *, num_layers, d_pad, n_real):
    """Whole StructureExtractor forward on one VMEM-resident block.

    x:(Np,Dp)  ea:(Ep,EDp)  g:(Ep,Np) bf16 one-hot(row)
    s:(Np,Ep) bf16 one-hot-T(col)  norm:(Ep,1)  deginv:(Np,1)
    wlin:(L,Dp,Dp)  blin:(L,1,Dp)  wedge:(EDp,L*Dp)  bedge:(1,L*Dp)
    root:(L,1,Dp)  gamma,beta:(1,(L+1)*Dp)  wout:((L+1)*Dp,Dp)  bout:(1,Dp)
    o:(Np,Dp)  xcat (scratch):(Np,(L+1)*Dp)
    """
    n_pad = x_ref.shape[0]

    # x_cat[:, 0:Dp] = input features (padded rows / columns are zero).
    xcat_ref[:, 0:d_pad] = x_ref[...]

    # Hoisted, reused across all layers.
    g = g_ref[...]                       # (Ep, Np) bf16, exact 0/1
    s = s_ref[...]                       # (Np, Ep) bf16, exact 0/1
    norm = norm_ref[...]                 # (Ep, 1)  f32 (0 on padded edges)
    deg_inv = jnp.broadcast_to(deginv_ref[...], (n_pad, d_pad))  # hoisted once

    # Loop-invariant: all layers' edge embeddings in ONE wide MXU matmul.
    e_emb_all = jnp.dot(ea_ref[...], wedge_ref[...],
                        preferred_element_type=jnp.float32) + bedge_ref[...]

    h = x_ref[...]
    for l in range(num_layers):
        # node linear (MXU, f32)
        hl = jnp.dot(h, wlin_ref[l],
                     preferred_element_type=jnp.float32) + blin_ref[l]
        e_emb = e_emb_all[:, l * d_pad:(l + 1) * d_pad]
        # gather source-node features per edge: bf16 x bf16 MXU, f32 acc
        x_j = jnp.dot(g, hl.astype(jnp.bfloat16),
                      preferred_element_type=jnp.float32)          # (Ep, Dp)
        # message: norm applied as a cheap (Ep,1) VPU broadcast multiply
        msg = norm * jnp.maximum(x_j + e_emb, 0.0)                  # f32
        # scatter-add: plain (Np,Ep)@(Ep,Dp) bf16 MXU, no transpose
        aggr = jnp.dot(s, msg.astype(jnp.bfloat16),
                       preferred_element_type=jnp.float32)          # (Np, Dp)
        # self / root term: relu(hl + root) / deg  (deg_inv = 0 on pad rows)
        self_term = jnp.maximum(hl + root_ref[l], 0.0) * deg_inv
        # GCNConv output + StructureExtractor ReLU
        h = jnp.maximum(aggr + self_term, 0.0)
        # write directly into the 128-aligned concat slot
        xcat_ref[:, (l + 1) * d_pad:(l + 2) * d_pad] = h

    # BatchNorm1d (training-mode batch stats, eps=1e-5) + output projection.
    # Padded rows of xcat are exactly zero, so sums over Np rows equal sums
    # over the real N rows; divide by the REAL N (E[x], E[x^2] form).
    xc = xcat_ref[...]
    inv_n = 1.0 / float(n_real)
    mean = jnp.sum(xc, axis=0, keepdims=True) * inv_n
    ex2 = jnp.sum(xc * xc, axis=0, keepdims=True) * inv_n
    var = ex2 - mean * mean                                  # biased variance
    y = (xc - mean) * jax.lax.rsqrt(var + 1e-5)
    y = y * gamma_ref[...] + beta_ref[...]
    o_ref[...] = jnp.dot(y, wout_ref[...],
                         preferred_element_type=jnp.float32) + bout_ref[...]


# ----------------------------------------------------------------------------
# Wrapper: build operators / pad to lane width / call the fused kernel
# ----------------------------------------------------------------------------

def _round_up(n, m):
    return ((n + m - 1) // m) * m


def _pad2(a, tr, tc):
    return jnp.pad(a, [(0, tr - a.shape[0]), (0, tc - a.shape[1])])


@functools.partial(jax.jit, static_argnames=("num_layers",))
def structure_extractor_forward(x, edge_index, edge_attr, params, num_layers=3):
    N, D = x.shape
    E, edge_dim = edge_attr.shape
    L = num_layers
    D_pad = _round_up(D, 128)
    ED_pad = _round_up(edge_dim, 128)
    N_pad = _round_up(N, 128)    # lane dim of the gather operator
    E_pad = _round_up(E, 128)    # lane dim of the scatter operator

    row, col = edge_index[0], edge_index[1]

    # degree of source nodes + 1 (matches torch_geometric.utils.degree(row)+1)
    deg = jnp.zeros((N,), jnp.float32).at[row].add(1.0) + 1.0
    deg_inv_sqrt = deg ** -0.5                               # deg >= 1, finite
    norm = deg_inv_sqrt[row] * deg_inv_sqrt[col]             # (E,)

    # padded edges get norm = 0 and padded nodes get deg_inv = 0 -> inert
    norm_pad = jnp.zeros((E_pad, 1), jnp.float32).at[:E, 0].set(norm)
    deg_inv_pad = jnp.zeros((N_pad, 1), jnp.float32).at[:N, 0].set(1.0 / deg)

    # gather operator (Ep, Np): one_hot(row); padded edge rows all-zero (bf16,
    # values exactly 0/1 so the cast is lossless)
    g_mat = jnp.zeros((E_pad, N_pad), jnp.bfloat16).at[:E].set(
        jax.nn.one_hot(row, N_pad, dtype=jnp.bfloat16))
    # scatter operator built directly in (Np, Ep) layout: s[n, e] = (col[e]==n)
    s_mat = jnp.zeros((N_pad, E_pad), jnp.bfloat16).at[:, :E].set(
        (jnp.arange(N_pad)[:, None] == col[None, :]).astype(jnp.bfloat16))

    # zero-pad features (padded rows/columns stay exactly zero through every
    # layer, so BN statistics and the projection are unchanged)
    x_pad = _pad2(x.astype(jnp.float32), N_pad, D_pad)
    ea_pad = _pad2(edge_attr.astype(jnp.float32), E_pad, ED_pad)

    gcn = params["gcn"]
    w_lin_s = jnp.stack([_pad2(p["w_lin"], D_pad, D_pad) for p in gcn])
    b_lin_s = jnp.stack([_pad2(p["b_lin"], 1, D_pad) for p in gcn])
    root_s = jnp.stack([_pad2(p["root"], 1, D_pad) for p in gcn])
    # all layers' edge encoders packed into one wide (EDp, L*Dp) weight
    w_edge_all = jnp.concatenate(
        [_pad2(p["w_edge"], ED_pad, D_pad) for p in gcn], axis=1)
    b_edge_all = jnp.concatenate(
        [_pad2(p["b_edge"], 1, D_pad) for p in gcn], axis=1)

    gamma_pad = _pad2(params["bn_gamma"].reshape(L + 1, D), L + 1,
                      D_pad).reshape(1, (L + 1) * D_pad)
    beta_pad = _pad2(params["bn_beta"].reshape(L + 1, D), L + 1,
                     D_pad).reshape(1, (L + 1) * D_pad)
    w_out_blk = params["w_out"].reshape(L + 1, D, D)
    w_out_pad = jnp.zeros((L + 1, D_pad, D_pad), jnp.float32)
    w_out_pad = w_out_pad.at[:, :D, :D].set(w_out_blk)
    w_out_pad = w_out_pad.reshape((L + 1) * D_pad, D_pad)
    b_out_pad = _pad2(params["b_out"], 1, D_pad)

    operands = (x_pad, ea_pad, g_mat, s_mat, norm_pad, deg_inv_pad,
                w_lin_s, b_lin_s, w_edge_all, b_edge_all, root_s,
                gamma_pad, beta_pad, w_out_pad, b_out_pad)

    # Size scoped VMEM from the actual resident buffers (gridless call -> no
    # double-buffering factor); leave Mosaic headroom below physical VMEM.
    op_bytes = sum(int(a.size) * a.dtype.itemsize for a in operands)
    out_bytes = N_pad * D_pad * 4
    scratch_bytes = N_pad * (L + 1) * D_pad * 4
    need = op_bytes + out_bytes + scratch_bytes + (8 << 20)
    try:
        vmem_cap = int(pltpu.get_tpu_info().vmem_capacity_bytes)
    except Exception:
        vmem_cap = 64 << 20              # conservative (v7x) fallback
    cap = max(vmem_cap - (16 << 20), 32 << 20)
    vmem_limit = int(min(need, cap))

    out_pad = pl.pallas_call(
        functools.partial(_fused_forward_kernel,
                          num_layers=L, d_pad=D_pad, n_real=N),
        out_shape=jax.ShapeDtypeStruct((N_pad, D_pad), jnp.float32),
        in_specs=[pl.BlockSpec(memory_space=pltpu.MemorySpace.VMEM)
                  for _ in range(len(operands))],
        out_specs=pl.BlockSpec(memory_space=pltpu.MemorySpace.VMEM),
        scratch_shapes=[pltpu.VMEM((N_pad, (L + 1) * D_pad), jnp.float32)],
        compiler_params=pltpu.CompilerParams(vmem_limit_bytes=vmem_limit),
    )(*operands)

    return out_pad[:N, :D]


# ----------------------------------------------------------------------------
# Pure-JAX reference (for a self-check)
# ----------------------------------------------------------------------------

def reference_forward(x, edge_index, edge_attr, params, num_layers=3):
    N, D = x.shape
    row, col = edge_index[0], edge_index[1]
    deg = jnp.zeros((N,), jnp.float32).at[row].add(1.0) + 1.0
    dis = deg ** -0.5
    norm = dis[row] * dis[col]

    x_cat = [x]
    h = x
    for layer in range(num_layers):
        p = params["gcn"][layer]
        hl = h @ p["w_lin"] + p["b_lin"]
        eemb = edge_attr @ p["w_edge"] + p["b_edge"]
        msg = norm[:, None] * jax.nn.relu(hl[row] + eemb)
        aggr = jnp.zeros_like(hl).at[col].add(msg)
        out = aggr + jax.nn.relu(hl + p["root"]) / deg[:, None]
        h = jax.nn.relu(out)
        x_cat.append(h)

    xf = jnp.concatenate(x_cat, axis=-1)
    mean = jnp.mean(xf, axis=0, keepdims=True)
    var = jnp.mean((xf - mean) ** 2, axis=0, keepdims=True)
    y = (xf - mean) / jnp.sqrt(var + 1e-5)
    y = y * params["bn_gamma"] + params["bn_beta"]
    return y @ params["w_out"] + params["b_out"]


# ----------------------------------------------------------------------------
# Deterministic parameter init (synthetic; weights stored pre-transposed (in,out))
# ----------------------------------------------------------------------------

def init_params(key, embed_dim, edge_dim, num_layers):
    params = {"gcn": []}
    keys = jax.random.split(key, num_layers * 5 + 4)
    k = 0
    for _ in range(num_layers):
        layer = {
            "w_lin": 0.1 * jax.random.normal(keys[k], (embed_dim, embed_dim), jnp.float32),
            "b_lin": 0.1 * jax.random.normal(keys[k + 1], (1, embed_dim), jnp.float32),
            "w_edge": 0.1 * jax.random.normal(keys[k + 2], (edge_dim, embed_dim), jnp.float32),
            "b_edge": 0.1 * jax.random.normal(keys[k + 3], (1, embed_dim), jnp.float32),
            "root": 0.1 * jax.random.normal(keys[k + 4], (1, embed_dim), jnp.float32),
        }
        params["gcn"].append(layer)
        k += 5
    inner_dim = (num_layers + 1) * embed_dim
    params["bn_gamma"] = jnp.ones((1, inner_dim), jnp.float32)
    params["bn_beta"] = jnp.zeros((1, inner_dim), jnp.float32)
    params["w_out"] = 0.1 * jax.random.normal(keys[k], (inner_dim, embed_dim), jnp.float32)
    params["b_out"] = 0.1 * jax.random.normal(keys[k + 1], (1, embed_dim), jnp.float32)
    return params


# ----------------------------------------------------------------------------
# Demo
# ----------------------------------------------------------------------------

if __name__ == "__main__":
    N, E, D, EDGE_DIM, L = 16, 48, 32, 16, 3

    key = jax.random.PRNGKey(0)
    kx, ke, kr, kc, kp = jax.random.split(key, 5)

    x = jax.random.normal(kx, (N, D), jnp.float32)
    edge_attr = jax.random.normal(ke, (E, EDGE_DIM), jnp.float32)
    row = jax.random.randint(kr, (E,), 0, N)
    col = jax.random.randint(kc, (E,), 0, N)
    edge_index = jnp.stack([row, col], axis=0)

    params = init_params(kp, D, EDGE_DIM, L)

    out = structure_extractor_forward(x, edge_index, edge_attr, params, num_layers=L)
    out = jax.block_until_ready(out)

    ref = reference_forward(x, edge_index, edge_attr, params, num_layers=L)
    assert out.shape == (N, D)
    # bf16 gather/scatter MXU path introduces small (~1e-3 relative) rounding;
    # compare against the f32 reference with a scale-relative tolerance.
    err = float(jnp.max(jnp.abs(out - ref)))
    scale = float(jnp.max(jnp.abs(ref))) + 1e-6
    assert err <= 5e-2 * scale, f"mismatch vs reference: err={err}, scale={scale}"

    print("KERNEL_OK")
</pallas_src>

<mosaic_0001>
module attributes {stable_mosaic.version = 11 : i64} {
  func.func @_fused_forward_kernel(%arg0: memref<128x128xf32, #tpu.memory_space<vmem>>, %arg1: memref<128x128xf32, #tpu.memory_space<vmem>>, %arg2: memref<128x128xbf16, #tpu.memory_space<vmem>>, %arg3: memref<128x128xbf16, #tpu.memory_space<vmem>>, %arg4: memref<128x1xf32, #tpu.memory_space<vmem>>, %arg5: memref<128x1xf32, #tpu.memory_space<vmem>>, %arg6: memref<3x128x128xf32, #tpu.memory_space<vmem>>, %arg7: memref<3x1x128xf32, #tpu.memory_space<vmem>>, %arg8: memref<128x384xf32, #tpu.memory_space<vmem>>, %arg9: memref<1x384xf32, #tpu.memory_space<vmem>>, %arg10: memref<3x1x128xf32, #tpu.memory_space<vmem>>, %arg11: memref<1x512xf32, #tpu.memory_space<vmem>>, %arg12: memref<1x512xf32, #tpu.memory_space<vmem>>, %arg13: memref<512x128xf32, #tpu.memory_space<vmem>>, %arg14: memref<1x128xf32, #tpu.memory_space<vmem>>, %arg15: memref<128x128xf32, #tpu.memory_space<vmem>>, %arg16: memref<128x512xf32, #tpu.memory_space<vmem>>) attributes {dimension_semantics = [], scalar_prefetch = 0 : i64, scratch_operands = 1 : i64, tpu.core_type = #tpu.core_type<tc>} {
    %c0 = arith.constant 0 : index
    %c0_0 = arith.constant 0 : index
    %0 = vector.load %arg0[%c0, %c0_0] : memref<128x128xf32, #tpu.memory_space<vmem>>, vector<128x128xf32>
    %c0_1 = arith.constant 0 : index
    %c0_2 = arith.constant 0 : index
    %1 = vector.load %arg16[%c0_1, %c0_2] : memref<128x512xf32, #tpu.memory_space<vmem>>, vector<128x128xf32>
    tpu.vector_store %arg16[%c0_1, %c0_2], %0 {strides = array<i32>} : memref<128x512xf32, #tpu.memory_space<vmem>>, vector<128x128xf32>,
    %c0_3 = arith.constant 0 : index
    %c0_4 = arith.constant 0 : index
    %2 = vector.load %arg2[%c0_3, %c0_4] : memref<128x128xbf16, #tpu.memory_space<vmem>>, vector<128x128xbf16>
    %c0_5 = arith.constant 0 : index
    %c0_6 = arith.constant 0 : index
    %3 = vector.load %arg3[%c0_5, %c0_6] : memref<128x128xbf16, #tpu.memory_space<vmem>>, vector<128x128xbf16>
    %c0_7 = arith.constant 0 : index
    %c0_8 = arith.constant 0 : index
    %4 = vector.load %arg4[%c0_7, %c0_8] : memref<128x1xf32, #tpu.memory_space<vmem>>, vector<128x1xf32>
    %c0_9 = arith.constant 0 : index
    %c0_10 = arith.constant 0 : index
    %5 = vector.load %arg5[%c0_9, %c0_10] : memref<128x1xf32, #tpu.memory_space<vmem>>, vector<128x1xf32>
    %6 = vector.shape_cast %5 : vector<128x1xf32> to vector<128x1xf32>
    %7 = vector.broadcast %6 : vector<128x1xf32> to vector<128x128xf32>
    %c0_11 = arith.constant 0 : index
    %c0_12 = arith.constant 0 : index
    %8 = vector.load %arg1[%c0_11, %c0_12] : memref<128x128xf32, #tpu.memory_space<vmem>>, vector<128x128xf32>
    %c0_13 = arith.constant 0 : index
    %c0_14 = arith.constant 0 : index
    %9 = vector.load %arg8[%c0_13, %c0_14] : memref<128x384xf32, #tpu.memory_space<vmem>>, vector<128x384xf32>
    %cst = arith.constant dense<0.000000e+00> : vector<128x384xf32>
    %10 = tpu.matmul %8, %9, %cst {dimension_numbers = #tpu.dot_dimension_numbers<[1], [0], [0], [1], [0, 0, 1, 1], [], []>} : vector<128x128xf32>, vector<128x384xf32>, vector<128x384xf32> -> vector<128x384xf32>
    %c0_15 = arith.constant 0 : index
    %c0_16 = arith.constant 0 : index
    %11 = vector.load %arg9[%c0_15, %c0_16] : memref<1x384xf32, #tpu.memory_space<vmem>>, vector<1x384xf32>
    %12 = vector.broadcast %11 : vector<1x384xf32> to vector<128x384xf32>
    %13 = arith.addf %10, %12 : vector<128x384xf32>
    %c0_17 = arith.constant 0 : index
    %c0_18 = arith.constant 0 : index
    %14 = vector.load %arg0[%c0_17, %c0_18] : memref<128x128xf32, #tpu.memory_space<vmem>>, vector<128x128xf32>
    %c0_19 = arith.constant 0 : index
    %c0_20 = arith.constant 0 : index
    %c0_21 = arith.constant 0 : index
    %15 = vector.load %arg6[%c0_19, %c0_20, %c0_21] : memref<3x128x128xf32, #tpu.memory_space<vmem>>, vector<1x128x128xf32>
    %16 = vector.shape_cast %15 : vector<1x128x128xf32> to vector<128x128xf32>
    %cst_22 = arith.constant dense<0.000000e+00> : vector<128x128xf32>
    %17 = tpu.matmul %14, %16, %cst_22 {dimension_numbers = #tpu.dot_dimension_numbers<[1], [0], [0], [1], [0, 0, 1, 1], [], []>} : vector<128x128xf32>, vector<128x128xf32>, vector<128x128xf32> -> vector<128x128xf32>
    %c0_23 = arith.constant 0 : index
    %c0_24 = arith.constant 0 : index
    %c0_25 = arith.constant 0 : index
    %18 = vector.load %arg7[%c0_23, %c0_24, %c0_25] : memref<3x1x128xf32, #tpu.memory_space<vmem>>, vector<1x1x128xf32>
    %19 = vector.shape_cast %18 : vector<1x1x128xf32> to vector<1x128xf32>
    %20 = vector.broadcast %19 : vector<1x128xf32> to vector<128x128xf32>
    %21 = arith.addf %17, %20 : vector<128x128xf32>
    %22 = vector.extract_strided_slice %13 {offsets = [0, 0], sizes = [128, 128], strides = [1, 1]} : vector<128x384xf32> to vector<128x128xf32>
    %23 = arith.truncf %21 : vector<128x128xf32> to vector<128x128xbf16>
    %cst_26 = arith.constant dense<0.000000e+00> : vector<128x128xf32>
    %24 = tpu.matmul %2, %23, %cst_26 {dimension_numbers = #tpu.dot_dimension_numbers<[1], [0], [0], [1], [0, 0, 1, 1], [], []>} : vector<128x128xbf16>, vector<128x128xbf16>, vector<128x128xf32> -> vector<128x128xf32>
    %25 = arith.addf %24, %22 : vector<128x128xf32>
    %cst_27 = arith.constant 0.000000e+00 : f32
    %26 = vector.broadcast %cst_27 : f32 to vector<128x128xf32>
    %27 = arith.maximumf %25, %26 : vector<128x128xf32>
    %28 = vector.broadcast %4 : vector<128x1xf32> to vector<128x128xf32>
    %29 = arith.mulf %28, %27 : vector<128x128xf32>
    %30 = arith.truncf %29 : vector<128x128xf32> to vector<128x128xbf16>
    %cst_28 = arith.constant dense<0.000000e+00> : vector<128x128xf32>
    %31 = tpu.matmul %3, %30, %cst_28 {dimension_numbers = #tpu.dot_dimension_numbers<[1], [0], [0], [1], [0, 0, 1, 1], [], []>} : vector<128x128xbf16>, vector<128x128xbf16>, vector<128x128xf32> -> vector<128x128xf32>
    %c0_29 = arith.constant 0 : index
    %c0_30 = arith.constant 0 : index
    %c0_31 = arith.constant 0 : index
    %32 = vector.load %arg10[%c0_29, %c0_30, %c0_31] : memref<3x1x128xf32, #tpu.memory_space<vmem>>, vector<1x1x128xf32>
    %33 = vector.shape_cast %32 : vector<1x1x128xf32> to vector<1x128xf32>
    %34 = vector.broadcast %33 : vector<1x128xf32> to vector<128x128xf32>
    %35 = arith.addf %21, %34 : vector<128x128xf32>
    %cst_32 = arith.constant 0.000000e+00 : f32
    %36 = vector.broadcast %cst_32 : f32 to vector<128x128xf32>
    %37 = arith.maximumf %35, %36 : vector<128x128xf32>
    %38 = arith.mulf %37, %7 : vector<128x128xf32>
    %39 = arith.addf %31, %38 : vector<128x128xf32>
    %cst_33 = arith.constant 0.000000e+00 : f32
    %40 = vector.broadcast %cst_33 : f32 to vector<128x128xf32>
    %41 = arith.maximumf %39, %40 : vector<128x128xf32>
    %c0_34 = arith.constant 0 : index
    %c128 = arith.constant 128 : index
    %42 = vector.load %arg16[%c0_34, %c128] : memref<128x512xf32, #tpu.memory_space<vmem>>, vector<128x128xf32>
    tpu.vector_store %arg16[%c0_34, %c128], %41 {strides = array<i32>} : memref<128x512xf32, #tpu.memory_space<vmem>>, vector<128x128xf32>,
    %c1 = arith.constant 1 : index
    %c0_35 = arith.constant 0 : index
    %c0_36 = arith.constant 0 : index
    %43 = vector.load %arg6[%c1, %c0_35, %c0_36] : memref<3x128x128xf32, #tpu.memory_space<vmem>>, vector<1x128x128xf32>
    %44 = vector.shape_cast %43 : vector<1x128x128xf32> to vector<128x128xf32>
    %cst_37 = arith.constant dense<0.000000e+00> : vector<128x128xf32>
    %45 = tpu.matmul %41, %44, %cst_37 {dimension_numbers = #tpu.dot_dimension_numbers<[1], [0], [0], [1], [0, 0, 1, 1], [], []>} : vector<128x128xf32>, vector<128x128xf32>, vector<128x128xf32> -> vector<128x128xf32>
    %c1_38 = arith.constant 1 : index
    %c0_39 = arith.constant 0 : index
    %c0_40 = arith.constant 0 : index
    %46 = vector.load %arg7[%c1_38, %c0_39, %c0_40] : memref<3x1x128xf32, #tpu.memory_space<vmem>>, vector<1x1x128xf32>
    %47 = vector.shape_cast %46 : vector<1x1x128xf32> to vector<1x128xf32>
    %48 = vector.broadcast %47 : vector<1x128xf32> to vector<128x128xf32>
    %49 = arith.addf %45, %48 : vector<128x128xf32>
    %50 = vector.extract_strided_slice %13 {offsets = [0, 128], sizes = [128, 128], strides = [1, 1]} : vector<128x384xf32> to vector<128x128xf32>
    %51 = arith.truncf %49 : vector<128x128xf32> to vector<128x128xbf16>
    %cst_41 = arith.constant dense<0.000000e+00> : vector<128x128xf32>
    %52 = tpu.matmul %2, %51, %cst_41 {dimension_numbers = #tpu.dot_dimension_numbers<[1], [0], [0], [1], [0, 0, 1, 1], [], []>} : vector<128x128xbf16>, vector<128x128xbf16>, vector<128x128xf32> -> vector<128x128xf32>
    %53 = arith.addf %52, %50 : vector<128x128xf32>
    %cst_42 = arith.constant 0.000000e+00 : f32
    %54 = vector.broadcast %cst_42 : f32 to vector<128x128xf32>
    %55 = arith.maximumf %53, %54 : vector<128x128xf32>
    %56 = vector.broadcast %4 : vector<128x1xf32> to vector<128x128xf32>
    %57 = arith.mulf %56, %55 : vector<128x128xf32>
    %58 = arith.truncf %57 : vector<128x128xf32> to vector<128x128xbf16>
    %cst_43 = arith.constant dense<0.000000e+00> : vector<128x128xf32>
    %59 = tpu.matmul %3, %58, %cst_43 {dimension_numbers = #tpu.dot_dimension_numbers<[1], [0], [0], [1], [0, 0, 1, 1], [], []>} : vector<128x128xbf16>, vector<128x128xbf16>, vector<128x128xf32> -> vector<128x128xf32>
    %c1_44 = arith.constant 1 : index
    %c0_45 = arith.constant 0 : index
    %c0_46 = arith.constant 0 : index
    %60 = vector.load %arg10[%c1_44, %c0_45, %c0_46] : memref<3x1x128xf32, #tpu.memory_space<vmem>>, vector<1x1x128xf32>
    %61 = vector.shape_cast %60 : vector<1x1x128xf32> to vector<1x128xf32>
    %62 = vector.broadcast %61 : vector<1x128xf32> to vector<128x128xf32>
    %63 = arith.addf %49, %62 : vector<128x128xf32>
    %cst_47 = arith.constant 0.000000e+00 : f32
    %64 = vector.broadcast %cst_47 : f32 to vector<128x128xf32>
    %65 = arith.maximumf %63, %64 : vector<128x128xf32>
    %66 = arith.mulf %65, %7 : vector<128x128xf32>
    %67 = arith.addf %59, %66 : vector<128x128xf32>
    %cst_48 = arith.constant 0.000000e+00 : f32
    %68 = vector.broadcast %cst_48 : f32 to vector<128x128xf32>
    %69 = arith.maximumf %67, %68 : vector<128x128xf32>
    %c0_49 = arith.constant 0 : index
    %c256 = arith.constant 256 : index
    %70 = vector.load %arg16[%c0_49, %c256] : memref<128x512xf32, #tpu.memory_space<vmem>>, vector<128x128xf32>
    tpu.vector_store %arg16[%c0_49, %c256], %69 {strides = array<i32>} : memref<128x512xf32, #tpu.memory_space<vmem>>, vector<128x128xf32>,
    %c2 = arith.constant 2 : index
    %c0_50 = arith.constant 0 : index
    %c0_51 = arith.constant 0 : index
    %71 = vector.load %arg6[%c2, %c0_50, %c0_51] : memref<3x128x128xf32, #tpu.memory_space<vmem>>, vector<1x128x128xf32>
    %72 = vector.shape_cast %71 : vector<1x128x128xf32> to vector<128x128xf32>
    %cst_52 = arith.constant dense<0.000000e+00> : vector<128x128xf32>
    %73 = tpu.matmul %69, %72, %cst_52 {dimension_numbers = #tpu.dot_dimension_numbers<[1], [0], [0], [1], [0, 0, 1, 1], [], []>} : vector<128x128xf32>, vector<128x128xf32>, vector<128x128xf32> -> vector<128x128xf32>
    %c2_53 = arith.constant 2 : index
    %c0_54 = arith.constant 0 : index
    %c0_55 = arith.constant 0 : index
    %74 = vector.load %arg7[%c2_53, %c0_54, %c0_55] : memref<3x1x128xf32, #tpu.memory_space<vmem>>, vector<1x1x128xf32>
    %75 = vector.shape_cast %74 : vector<1x1x128xf32> to vector<1x128xf32>
    %76 = vector.broadcast %75 : vector<1x128xf32> to vector<128x128xf32>
    %77 = arith.addf %73, %76 : vector<128x128xf32>
    %78 = vector.extract_strided_slice %13 {offsets = [0, 256], sizes = [128, 128], strides = [1, 1]} : vector<128x384xf32> to vector<128x128xf32>
    %79 = arith.truncf %77 : vector<128x128xf32> to vector<128x128xbf16>
    %cst_56 = arith.constant dense<0.000000e+00> : vector<128x128xf32>
    %80 = tpu.matmul %2, %79, %cst_56 {dimension_numbers = #tpu.dot_dimension_numbers<[1], [0], [0], [1], [0, 0, 1, 1], [], []>} : vector<128x128xbf16>, vector<128x128xbf16>, vector<128x128xf32> -> vector<128x128xf32>
    %81 = arith.addf %80, %78 : vector<128x128xf32>
    %cst_57 = arith.constant 0.000000e+00 : f32
    %82 = vector.broadcast %cst_57 : f32 to vector<128x128xf32>
    %83 = arith.maximumf %81, %82 : vector<128x128xf32>
    %84 = vector.broadcast %4 : vector<128x1xf32> to vector<128x128xf32>
    %85 = arith.mulf %84, %83 : vector<128x128xf32>
    %86 = arith.truncf %85 : vector<128x128xf32> to vector<128x128xbf16>
    %cst_58 = arith.constant dense<0.000000e+00> : vector<128x128xf32>
    %87 = tpu.matmul %3, %86, %cst_58 {dimension_numbers = #tpu.dot_dimension_numbers<[1], [0], [0], [1], [0, 0, 1, 1], [], []>} : vector<128x128xbf16>, vector<128x128xbf16>, vector<128x128xf32> -> vector<128x128xf32>
    %c2_59 = arith.constant 2 : index
    %c0_60 = arith.constant 0 : index
    %c0_61 = arith.constant 0 : index
    %88 = vector.load %arg10[%c2_59, %c0_60, %c0_61] : memref<3x1x128xf32, #tpu.memory_space<vmem>>, vector<1x1x128xf32>
    %89 = vector.shape_cast %88 : vector<1x1x128xf32> to vector<1x128xf32>
    %90 = vector.broadcast %89 : vector<1x128xf32> to vector<128x128xf32>
    %91 = arith.addf %77, %90 : vector<128x128xf32>
    %cst_62 = arith.constant 0.000000e+00 : f32
    %92 = vector.broadcast %cst_62 : f32 to vector<128x128xf32>
    %93 = arith.maximumf %91, %92 : vector<128x128xf32>
    %94 = arith.mulf %93, %7 : vector<128x128xf32>
    %95 = arith.addf %87, %94 : vector<128x128xf32>
    %cst_63 = arith.constant 0.000000e+00 : f32
    %96 = vector.broadcast %cst_63 : f32 to vector<128x128xf32>
    %97 = arith.maximumf %95, %96 : vector<128x128xf32>
    %c0_64 = arith.constant 0 : index
    %c384 = arith.constant 384 : index
    %98 = vector.load %arg16[%c0_64, %c384] : memref<128x512xf32, #tpu.memory_space<vmem>>, vector<128x128xf32>
    tpu.vector_store %arg16[%c0_64, %c384], %97 {strides = array<i32>} : memref<128x512xf32, #tpu.memory_space<vmem>>, vector<128x128xf32>,
    %c0_65 = arith.constant 0 : index
    %c0_66 = arith.constant 0 : index
    %99 = vector.load %arg16[%c0_65, %c0_66] : memref<128x512xf32, #tpu.memory_space<vmem>>, vector<128x512xf32>
    %cst_67 = arith.constant dense<0.000000e+00> : vector<512xf32>
    %100 = vector.multi_reduction <add>, %99, %cst_67 [0] : vector<128x512xf32> to vector<512xf32>
    %101 = vector.shape_cast %100 : vector<512xf32> to vector<1x512xf32>
    %cst_68 = arith.constant 6.250000e-02 : f32
    %102 = vector.broadcast %cst_68 : f32 to vector<1x512xf32>
    %103 = arith.mulf %101, %102 : vector<1x512xf32>
    %104 = arith.mulf %99, %99 : vector<128x512xf32>
    %cst_69 = arith.constant dense<0.000000e+00> : vector<512xf32>
    %105 = vector.multi_reduction <add>, %104, %cst_69 [0] : vector<128x512xf32> to vector<512xf32>
    %106 = vector.shape_cast %105 : vector<512xf32> to vector<1x512xf32>
    %cst_70 = arith.constant 6.250000e-02 : f32
    %107 = vector.broadcast %cst_70 : f32 to vector<1x512xf32>
    %108 = arith.mulf %106, %107 : vector<1x512xf32>
    %109 = arith.mulf %103, %103 : vector<1x512xf32>
    %110 = arith.subf %108, %109 : vector<1x512xf32>
    %111 = vector.broadcast %103 : vector<1x512xf32> to vector<128x512xf32>
    %112 = arith.subf %99, %111 : vector<128x512xf32>
    %cst_71 = arith.constant 9.99999974E-6 : f32
    %113 = vector.broadcast %cst_71 : f32 to vector<1x512xf32>
    %114 = arith.addf %110, %113 : vector<1x512xf32>
    %115 = math.rsqrt %114 : vector<1x512xf32>
    %116 = vector.broadcast %115 : vector<1x512xf32> to vector<128x512xf32>
    %117 = arith.mulf %112, %116 : vector<128x512xf32>
    %c0_72 = arith.constant 0 : index
    %c0_73 = arith.constant 0 : index
    %118 = vector.load %arg11[%c0_72, %c0_73] : memref<1x512xf32, #tpu.memory_space<vmem>>, vector<1x512xf32>
    %119 = vector.broadcast %118 : vector<1x512xf32> to vector<128x512xf32>
    %120 = arith.mulf %117, %119 : vector<128x512xf32>
    %c0_74 = arith.constant 0 : index
    %c0_75 = arith.constant 0 : index
    %121 = vector.load %arg12[%c0_74, %c0_75] : memref<1x512xf32, #tpu.memory_space<vmem>>, vector<1x512xf32>
    %122 = vector.broadcast %121 : vector<1x512xf32> to vector<128x512xf32>
    %123 = arith.addf %120, %122 : vector<128x512xf32>
    %c0_76 = arith.constant 0 : index
    %c0_77 = arith.constant 0 : index
    %124 = vector.load %arg13[%c0_76, %c0_77] : memref<512x128xf32, #tpu.memory_space<vmem>>, vector<512x128xf32>
    %cst_78 = arith.constant dense<0.000000e+00> : vector<128x128xf32>
    %125 = tpu.matmul %123, %124, %cst_78 {dimension_numbers = #tpu.dot_dimension_numbers<[1], [0], [0], [1], [0, 0, 1, 1], [], []>} : vector<128x512xf32>, vector<512x128xf32>, vector<128x128xf32> -> vector<128x128xf32>
    %c0_79 = arith.constant 0 : index
    %c0_80 = arith.constant 0 : index
    %126 = vector.load %arg14[%c0_79, %c0_80] : memref<1x128xf32, #tpu.memory_space<vmem>>, vector<1x128xf32>
    %127 = vector.broadcast %126 : vector<1x128xf32> to vector<128x128xf32>
    %128 = arith.addf %125, %127 : vector<128x128xf32>
    %c0_81 = arith.constant 0 : index
    %c0_82 = arith.constant 0 : index
    %129 = vector.load %arg15[%c0_81, %c0_82] : memref<128x128xf32, #tpu.memory_space<vmem>>, vector<128x128xf32>
    tpu.vector_store %arg15[%c0_81, %c0_82], %128 {strides = array<i32>} : memref<128x128xf32, #tpu.memory_space<vmem>>, vector<128x128xf32>,
    return
  }
}

</mosaic_0001>

<llo_original>
// kernel: structure_extractor_forward.1
$region0: #{structure_extractor_forward.1}
  #allocation0 [shape = 'u32[]', space=smem, size = 0x4, offset = 0x4, fixed_abs, tag = 'smem constant byte address 0x4 - core index']
  #allocation1 [shape = 'u32[72,128]{1,0:T(1,128)}', space=vmem, size = 0x9000, scoped, tag = 'internal scratch']
  #allocation2 [shape = 'f32[128,512]{1,0:T(8,128)}', space=vmem, size = 0x40000, scoped, tag = 'scratch operand']
  %s0 = inlined_call_operand.vmem [shape: f32[128,128], index: 0, kind: input, shape index: {}]
  %s1 = inlined_call_operand.vmem [shape: f32[128,128], index: 1, kind: input, shape index: {}]
  %s2 = inlined_call_operand.vmem [shape: bf16[128,128], index: 2, kind: input, shape index: {}]
  %s3 = inlined_call_operand.vmem [shape: bf16[128,128], index: 3, kind: input, shape index: {}]
  %s4 = inlined_call_operand.vmem [shape: f32[128,1], index: 4, kind: input, shape index: {}]
  %s5 = inlined_call_operand.vmem [shape: f32[128,1], index: 5, kind: input, shape index: {}]
  %s6 = inlined_call_operand.vmem [shape: f32[3,128,128], index: 6, kind: input, shape index: {}]
  %s7 = inlined_call_operand.vmem [shape: f32[3,1,128], index: 7, kind: input, shape index: {}]
  %s8 = inlined_call_operand.vmem [shape: f32[128,384], index: 8, kind: input, shape index: {}]
  %s9 = inlined_call_operand.vmem [shape: f32[1,384], index: 9, kind: input, shape index: {}]
  %s10 = inlined_call_operand.vmem [shape: f32[3,1,128], index: 10, kind: input, shape index: {}]
  %s11 = inlined_call_operand.vmem [shape: f32[1,512], index: 11, kind: input, shape index: {}]
  %s12 = inlined_call_operand.vmem [shape: f32[1,512], index: 12, kind: input, shape index: {}]
  %s13 = inlined_call_operand.vmem [shape: f32[512,128], index: 13, kind: input, shape index: {}]
  %s14 = inlined_call_operand.vmem [shape: f32[1,128], index: 14, kind: input, shape index: {}]
  %s15 = inlined_call_operand.vmem [shape: f32[128,128], index: 15, kind: output, shape index: {}]
  %s16 = sld [smem:[#allocation0]]
  $region70: #{structure_extractor_forward.1} parent=0
    _
  %s18 = ssub.s32 1, %s16
  %s19 = scalar_select 0, %s18, %s16
  // Predicated region
  $region2: #{structure_extractor_forward.1} parent=0 // pred_check
    _
  $region3: #{structure_extractor_forward.1} parent=0 // pred_check_branch
    %21 = sbr.rel (0) target = $region5
  $region4: #{structure_extractor_forward.1} parent=0 // pred_region
    _
  $region5: #{structure_extractor_forward.1} parent=0 // pred_fallthru
    _
  // Predicated region
  $region6: #{structure_extractor_forward.1} parent=0 // pred_check
    _
  $region7: #{structure_extractor_forward.1} parent=0 // pred_check_branch
    %23 = sbr.rel (0) target = $region9
  $region8: #{structure_extractor_forward.1} parent=0 // pred_region
    _
  $region9: #{structure_extractor_forward.1} parent=0 // pred_fallthru
    _
  // Predicated region
  $region10: #{structure_extractor_forward.1} parent=0 // pred_check
    _
  $region11: #{structure_extractor_forward.1} parent=0 // pred_check_branch
    %25 = sbr.rel (0) target = $region13
  $region12: #{structure_extractor_forward.1} parent=0 // pred_region
    _
  $region13: #{structure_extractor_forward.1} parent=0 // pred_fallthru
    _
  // Predicated region
  $region14: #{structure_extractor_forward.1} parent=0 // pred_check
    _
  $region15: #{structure_extractor_forward.1} parent=0 // pred_check_branch
    %27 = sbr.rel (0) target = $region17
  $region16: #{structure_extractor_forward.1} parent=0 // pred_region
    _
  $region17: #{structure_extractor_forward.1} parent=0 // pred_fallthru
    _
  // Predicated region
  $region18: #{structure_extractor_forward.1} parent=0 // pred_check
    _
  $region19: #{structure_extractor_forward.1} parent=0 // pred_check_branch
    %29 = sbr.rel (0) target = $region21
  $region20: #{structure_extractor_forward.1} parent=0 // pred_region
    _
  $region21: #{structure_extractor_forward.1} parent=0 // pred_fallthru
    _
  // Predicated region
  $region22: #{structure_extractor_forward.1} parent=0 // pred_check
    _
  $region23: #{structure_extractor_forward.1} parent=0 // pred_check_branch
    %31 = sbr.rel (0) target = $region25
  $region24: #{structure_extractor_forward.1} parent=0 // pred_region
    _
  $region25: #{structure_extractor_forward.1} parent=0 // pred_fallthru
    _
  // Predicated region
  $region26: #{structure_extractor_forward.1} parent=0 // pred_check
    _
  $region27: #{structure_extractor_forward.1} parent=0 // pred_check_branch
    %33 = sbr.rel (0) target = $region29
  $region28: #{structure_extractor_forward.1} parent=0 // pred_region
    _
  $region29: #{structure_extractor_forward.1} parent=0 // pred_fallthru
    _
  // Predicated region
  $region30: #{structure_extractor_forward.1} parent=0 // pred_check
    _
  $region31: #{structure_extractor_forward.1} parent=0 // pred_check_branch
    %35 = sbr.rel (0) target = $region33
  $region32: #{structure_extractor_forward.1} parent=0 // pred_region
    _
  $region33: #{structure_extractor_forward.1} parent=0 // pred_fallthru
    _
  // Predicated region
  $region34: #{structure_extractor_forward.1} parent=0 // pred_check
    _
  $region35: #{structure_extractor_forward.1} parent=0 // pred_check_branch
    %37 = sbr.rel (0) target = $region37
  $region36: #{structure_extractor_forward.1} parent=0 // pred_region
    _
  $region37: #{structure_extractor_forward.1} parent=0 // pred_fallthru
    _
  // Predicated region
  $region38: #{structure_extractor_forward.1} parent=0 // pred_check
    _
  $region39: #{structure_extractor_forward.1} parent=0 // pred_check_branch
    %39 = sbr.rel (0) target = $region41
  $region40: #{structure_extractor_forward.1} parent=0 // pred_region
    _
  $region41: #{structure_extractor_forward.1} parent=0 // pred_fallthru
    _
  // Predicated region
  $region42: #{structure_extractor_forward.1} parent=0 // pred_check
    _
  $region43: #{structure_extractor_forward.1} parent=0 // pred_check_branch
    %41 = sbr.rel (0) target = $region45
  $region44: #{structure_extractor_forward.1} parent=0 // pred_region
    _
  $region45: #{structure_extractor_forward.1} parent=0 // pred_fallthru
    _
  // Predicated region
  $region46: #{structure_extractor_forward.1} parent=0 // pred_check
    _
  $region47: #{structure_extractor_forward.1} parent=0 // pred_check_branch
    %43 = sbr.rel (0) target = $region49
  $region48: #{structure_extractor_forward.1} parent=0 // pred_region
    _
  $region49: #{structure_extractor_forward.1} parent=0 // pred_fallthru
    _
  // Predicated region
  $region50: #{structure_extractor_forward.1} parent=0 // pred_check
    _
  $region51: #{structure_extractor_forward.1} parent=0 // pred_check_branch
    %45 = sbr.rel (0) target = $region53
  $region52: #{structure_extractor_forward.1} parent=0 // pred_region
    _
  $region53: #{structure_extractor_forward.1} parent=0 // pred_fallthru
    _
  // Predicated region
  $region54: #{structure_extractor_forward.1} parent=0 // pred_check
    _
  $region55: #{structure_extractor_forward.1} parent=0 // pred_check_branch
    %47 = sbr.rel (0) target = $region57
  $region56: #{structure_extractor_forward.1} parent=0 // pred_region
    _
  $region57: #{structure_extractor_forward.1} parent=0 // pred_fallthru
    _
  // Predicated region
  $region58: #{structure_extractor_forward.1} parent=0 // pred_check
    _
  $region59: #{structure_extractor_forward.1} parent=0 // pred_check_branch
    %49 = sbr.rel (0) target = $region61
  $region60: #{structure_extractor_forward.1} parent=0 // pred_region
    _
  $region61: #{structure_extractor_forward.1} parent=0 // pred_fallthru
    _
  %v50 = vld [vmem:[%s0] sm:$0xff]
  %v51 = vld [vmem:[%s0 + $0x8] sm:$0xff]
  %v52 = vld [vmem:[%s0 + $0x10] sm:$0xff]
  %v53 = vld [vmem:[%s0 + $0x18] sm:$0xff]
  %v54 = vld [vmem:[%s0 + $0x20] sm:$0xff]
  %v55 = vld [vmem:[%s0 + $0x28] sm:$0xff]
  %v56 = vld [vmem:[%s0 + $0x30] sm:$0xff]
  %v57 = vld [vmem:[%s0 + $0x38] sm:$0xff]
  %v58 = vld [vmem:[%s0 + $0x40] sm:$0xff]
  %v59 = vld [vmem:[%s0 + $0x48] sm:$0xff]
  %v60 = vld [vmem:[%s0 + $0x50] sm:$0xff]
  %v61 = vld [vmem:[%s0 + $0x58] sm:$0xff]
  %v62 = vld [vmem:[%s0 + $0x60] sm:$0xff]
  %v63 = vld [vmem:[%s0 + $0x68] sm:$0xff]
  %v64 = vld [vmem:[%s0 + $0x70] sm:$0xff]
  %v65 = vld [vmem:[%s0 + $0x78] sm:$0xff]
  %66 = vst [vmem:[#allocation2] sm:$0xff] %v50
  %67 = vst [vmem:[#allocation2 + $0x20] sm:$0xff] %v51
  %68 = vst [vmem:[#allocation2 + $0x40] sm:$0xff] %v52
  %69 = vst [vmem:[#allocation2 + $0x60] sm:$0xff] %v53
  %70 = vst [vmem:[#allocation2 + $0x80] sm:$0xff] %v54
  %71 = vst [vmem:[#allocation2 + $0xa0] sm:$0xff] %v55
  %72 = vst [vmem:[#allocation2 + $0xc0] sm:$0xff] %v56
  %73 = vst [vmem:[#allocation2 + $0xe0] sm:$0xff] %v57
  %74 = vst [vmem:[#allocation2 + $0x100] sm:$0xff] %v58
  %75 = vst [vmem:[#allocation2 + $0x120] sm:$0xff] %v59
  %76 = vst [vmem:[#allocation2 + $0x140] sm:$0xff] %v60
  %77 = vst [vmem:[#allocation2 + $0x160] sm:$0xff] %v61
  %78 = vst [vmem:[#allocation2 + $0x180] sm:$0xff] %v62
  %79 = vst [vmem:[#allocation2 + $0x1a0] sm:$0xff] %v63
  %80 = vst [vmem:[#allocation2 + $0x1c0] sm:$0xff] %v64
  %81 = vst [vmem:[#allocation2 + $0x1e0] sm:$0xff] %v65
  %v82 = vld [vmem:[%s2] sm:$0xf]
  %v83 = vld [vmem:[%s2 + $0x4] sm:$0xf]
  %v84 = vld [vmem:[%s2 + $0x8] sm:$0xf]
  %v85 = vld [vmem:[%s2 + $0xc] sm:$0xf]
  %v86 = vld [vmem:[%s2 + $0x10] sm:$0xf]
  %v87 = vld [vmem:[%s2 + $0x14] sm:$0xf]
  %v88 = vld [vmem:[%s2 + $0x18] sm:$0xf]
  %v89 = vld [vmem:[%s2 + $0x1c] sm:$0xf]
  %v90 = vld [vmem:[%s2 + $0x20] sm:$0xf]
  %v91 = vld [vmem:[%s2 + $0x24] sm:$0xf]
  %v92 = vld [vmem:[%s2 + $0x28] sm:$0xf]
  %v93 = vld [vmem:[%s2 + $0x2c] sm:$0xf]
  %v94 = vld [vmem:[%s2 + $0x30] sm:$0xf]
  %v95 = vld [vmem:[%s2 + $0x34] sm:$0xf]
  %v96 = vld [vmem:[%s2 + $0x38] sm:$0xf]
  %v97 = vld [vmem:[%s2 + $0x3c] sm:$0xf]
  %v98 = vld [vmem:[%s3] sm:$0xf]
  %v99 = vld [vmem:[%s3 + $0x4] sm:$0xf]
  %v100 = vld [vmem:[%s3 + $0x8] sm:$0xf]
  %v101 = vld [vmem:[%s3 + $0xc] sm:$0xf]
  %v102 = vld [vmem:[%s3 + $0x10] sm:$0xf]
  %v103 = vld [vmem:[%s3 + $0x14] sm:$0xf]
  %v104 = vld [vmem:[%s3 + $0x18] sm:$0xf]
  %v105 = vld [vmem:[%s3 + $0x1c] sm:$0xf]
  %v106 = vld [vmem:[%s3 + $0x20] sm:$0xf]
  %v107 = vld [vmem:[%s3 + $0x24] sm:$0xf]
  %v108 = vld [vmem:[%s3 + $0x28] sm:$0xf]
  %v109 = vld [vmem:[%s3 + $0x2c] sm:$0xf]
  %v110 = vld [vmem:[%s3 + $0x30] sm:$0xf]
  %v111 = vld [vmem:[%s3 + $0x34] sm:$0xf]
  %v112 = vld [vmem:[%s3 + $0x38] sm:$0xf]
  %v113 = vld [vmem:[%s3 + $0x3c] sm:$0xf]
  %v114 = vld [vmem:[%s4] sm:$0xff]
  %v115 = vld [vmem:[%s4 + $0x8] sm:$0xff]
  %v116 = vld [vmem:[%s4 + $0x10] sm:$0xff]
  %v117 = vld [vmem:[%s4 + $0x18] sm:$0xff]
  %v118 = vld [vmem:[%s4 + $0x20] sm:$0xff]
  %v119 = vld [vmem:[%s4 + $0x28] sm:$0xff]
  %v120 = vld [vmem:[%s4 + $0x30] sm:$0xff]
  %v121 = vld [vmem:[%s4 + $0x38] sm:$0xff]
  %v122 = vld [vmem:[%s4 + $0x40] sm:$0xff]
  %v123 = vld [vmem:[%s4 + $0x48] sm:$0xff]
  %v124 = vld [vmem:[%s4 + $0x50] sm:$0xff]
  %v125 = vld [vmem:[%s4 + $0x58] sm:$0xff]
  %v126 = vld [vmem:[%s4 + $0x60] sm:$0xff]
  %v127 = vld [vmem:[%s4 + $0x68] sm:$0xff]
  %v128 = vld [vmem:[%s4 + $0x70] sm:$0xff]
  %v129 = vld [vmem:[%s4 + $0x78] sm:$0xff]
  %v130 = vld [vmem:[%s5] sm:$0xff]
  %v131 = vld [vmem:[%s5 + $0x8] sm:$0xff]
  %v132 = vld [vmem:[%s5 + $0x10] sm:$0xff]
  %v133 = vld [vmem:[%s5 + $0x18] sm:$0xff]
  %v134 = vld [vmem:[%s5 + $0x20] sm:$0xff]
  %v135 = vld [vmem:[%s5 + $0x28] sm:$0xff]
  %v136 = vld [vmem:[%s5 + $0x30] sm:$0xff]
  %v137 = vld [vmem:[%s5 + $0x38] sm:$0xff]
  %v138 = vld [vmem:[%s5 + $0x40] sm:$0xff]
  %v139 = vld [vmem:[%s5 + $0x48] sm:$0xff]
  %v140 = vld [vmem:[%s5 + $0x50] sm:$0xff]
  %v141 = vld [vmem:[%s5 + $0x58] sm:$0xff]
  %v142 = vld [vmem:[%s5 + $0x60] sm:$0xff]
  %v143 = vld [vmem:[%s5 + $0x68] sm:$0xff]
  %v144 = vld [vmem:[%s5 + $0x70] sm:$0xff]
  %v145 = vld [vmem:[%s5 + $0x78] sm:$0xff]
  %147 = vset.pattern.permute.xlu0 0
  %148 = vperm.xlu0 %147, %v130
  %v149 = vpop.permute.xlu0 %148
  %152 = vset.pattern.permute.xlu0 0
  %153 = vperm.xlu0 %152, %v131
  %v154 = vpop.permute.xlu0 %153
  %157 = vset.pattern.permute.xlu0 0
  %158 = vperm.xlu0 %157, %v132
  %v159 = vpop.permute.xlu0 %158
  %162 = vset.pattern.permute.xlu0 0
  %163 = vperm.xlu0 %162, %v133
  %v164 = vpop.permute.xlu0 %163
  %167 = vset.pattern.permute.xlu0 0
  %168 = vperm.xlu0 %167, %v134
  %v169 = vpop.permute.xlu0 %168
  %172 = vset.pattern.permute.xlu0 0
  %173 = vperm.xlu0 %172, %v135
  %v174 = vpop.permute.xlu0 %173
  %177 = vset.pattern.permute.xlu0 0
  %178 = vperm.xlu0 %177, %v136
  %v179 = vpop.permute.xlu0 %178
  %182 = vset.pattern.permute.xlu0 0
  %183 = vperm.xlu0 %182, %v137
  %v184 = vpop.permute.xlu0 %183
  %187 = vset.pattern.permute.xlu0 0
  %188 = vperm.xlu0 %187, %v138
  %v189 = vpop.permute.xlu0 %188
  %192 = vset.pattern.permute.xlu0 0
  %193 = vperm.xlu0 %192, %v139
  %v194 = vpop.permute.xlu0 %193
  %197 = vset.pattern.permute.xlu0 0
  %198 = vperm.xlu0 %197, %v140
  %v199 = vpop.permute.xlu0 %198
  %202 = vset.pattern.permute.xlu0 0
  %203 = vperm.xlu0 %202, %v141
  %v204 = vpop.permute.xlu0 %203
  %207 = vset.pattern.permute.xlu0 0
  %208 = vperm.xlu0 %207, %v142
  %v209 = vpop.permute.xlu0 %208
  %212 = vset.pattern.permute.xlu0 0
  %213 = vperm.xlu0 %212, %v143
  %v214 = vpop.permute.xlu0 %213
  %217 = vset.pattern.permute.xlu0 0
  %218 = vperm.xlu0 %217, %v144
  %v219 = vpop.permute.xlu0 %218
  %222 = vset.pattern.permute.xlu0 0
  %223 = vperm.xlu0 %222, %v145
  %v224 = vpop.permute.xlu0 %223
  %v226 = vld [vmem:[%s1] sm:$0xff]
  %v227 = vld [vmem:[%s1 + $0x8] sm:$0xff]
  %v228 = vld [vmem:[%s1 + $0x10] sm:$0xff]
  %v229 = vld [vmem:[%s1 + $0x18] sm:$0xff]
  %v230 = vld [vmem:[%s1 + $0x20] sm:$0xff]
  %v231 = vld [vmem:[%s1 + $0x28] sm:$0xff]
  %v232 = vld [vmem:[%s1 + $0x30] sm:$0xff]
  %v233 = vld [vmem:[%s1 + $0x38] sm:$0xff]
  %v234 = vld [vmem:[%s1 + $0x40] sm:$0xff]
  %v235 = vld [vmem:[%s1 + $0x48] sm:$0xff]
  %v236 = vld [vmem:[%s1 + $0x50] sm:$0xff]
  %v237 = vld [vmem:[%s1 + $0x58] sm:$0xff]
  %v238 = vld [vmem:[%s1 + $0x60] sm:$0xff]
  %v239 = vld [vmem:[%s1 + $0x68] sm:$0xff]
  %v240 = vld [vmem:[%s1 + $0x70] sm:$0xff]
  %v241 = vld [vmem:[%s1 + $0x78] sm:$0xff]
  %v242 = vld [vmem:[%s8] sm:$0xff]
  %v243 = vld [vmem:[%s8 + $0x8] sm:$0xff]
  %v244 = vld [vmem:[%s8 + $0x10] sm:$0xff]
  %v245 = vld [vmem:[%s8 + $0x18] sm:$0xff]
  %v246 = vld [vmem:[%s8 + $0x20] sm:$0xff]
  %v247 = vld [vmem:[%s8 + $0x28] sm:$0xff]
  %v248 = vld [vmem:[%s8 + $0x30] sm:$0xff]
  %v249 = vld [vmem:[%s8 + $0x38] sm:$0xff]
  %v250 = vld [vmem:[%s8 + $0x40] sm:$0xff]
  %v251 = vld [vmem:[%s8 + $0x48] sm:$0xff]
  %v252 = vld [vmem:[%s8 + $0x50] sm:$0xff]
  %v253 = vld [vmem:[%s8 + $0x58] sm:$0xff]
  %v254 = vld [vmem:[%s8 + $0x60] sm:$0xff]
  %v255 = vld [vmem:[%s8 + $0x68] sm:$0xff]
  %v256 = vld [vmem:[%s8 + $0x70] sm:$0xff]
  %v257 = vld [vmem:[%s8 + $0x78] sm:$0xff]
  %v258 = vld [vmem:[%s8 + $0x80] sm:$0xff]
  %v259 = vld [vmem:[%s8 + $0x88] sm:$0xff]
  %v260 = vld [vmem:[%s8 + $0x90] sm:$0xff]
  %v261 = vld [vmem:[%s8 + $0x98] sm:$0xff]
  %v262 = vld [vmem:[%s8 + $0xa0] sm:$0xff]
  %v263 = vld [vmem:[%s8 + $0xa8] sm:$0xff]
  %v264 = vld [vmem:[%s8 + $0xb0] sm:$0xff]
  %v265 = vld [vmem:[%s8 + $0xb8] sm:$0xff]
  %v266 = vld [vmem:[%s8 + $0xc0] sm:$0xff]
  %v267 = vld [vmem:[%s8 + $0xc8] sm:$0xff]
  %v268 = vld [vmem:[%s8 + $0xd0] sm:$0xff]
  %v269 = vld [vmem:[%s8 + $0xd8] sm:$0xff]
  %v270 = vld [vmem:[%s8 + $0xe0] sm:$0xff]
  %v271 = vld [vmem:[%s8 + $0xe8] sm:$0xff]
  %v272 = vld [vmem:[%s8 + $0xf0] sm:$0xff]
  %v273 = vld [vmem:[%s8 + $0xf8] sm:$0xff]
  %v274 = vld [vmem:[%s8 + $0x100] sm:$0xff]
  %v275 = vld [vmem:[%s8 + $0x108] sm:$0xff]
  %v276 = vld [vmem:[%s8 + $0x110] sm:$0xff]
  %v277 = vld [vmem:[%s8 + $0x118] sm:$0xff]
  %v278 = vld [vmem:[%s8 + $0x120] sm:$0xff]
  %v279 = vld [vmem:[%s8 + $0x128] sm:$0xff]
  %v280 = vld [vmem:[%s8 + $0x130] sm:$0xff]
  %v281 = vld [vmem:[%s8 + $0x138] sm:$0xff]
  %v282 = vld [vmem:[%s8 + $0x140] sm:$0xff]
  %v283 = vld [vmem:[%s8 + $0x148] sm:$0xff]
  %v284 = vld [vmem:[%s8 + $0x150] sm:$0xff]
  %v285 = vld [vmem:[%s8 + $0x158] sm:$0xff]
  %v286 = vld [vmem:[%s8 + $0x160] sm:$0xff]
  %v287 = vld [vmem:[%s8 + $0x168] sm:$0xff]
  %v288 = vld [vmem:[%s8 + $0x170] sm:$0xff]
  %v289 = vld [vmem:[%s8 + $0x178] sm:$0xff]
  %v290 = vld [vmem:[%s9] sm:$0x7]
  %v292 = vperm.slane %v290, 0
  %v293 = vperm.slane %v290, 1
  %v294 = vperm.slane %v290, 2
  %298 = vmatpush.msra.mxu0 %v287
  %299 = vmatpush.msra.mxu0 %v284
  %300 = vmatpush.msra.mxu0 %v281
  %301 = vmatpush.msra.mxu0 %v278
  %302 = vmatpush.msra.mxu0 %v275
  %303 = vmatpush.msra.mxu0 %v272
  %304 = vmatpush.msra.mxu0 %v269
  %305 = vmatpush.msra.mxu0 %v266
  %306 = vmatpush.msra.mxu0 %v263
  %307 = vmatpush.msra.mxu0 %v260
  %308 = vmatpush.msra.mxu0 %v257
  %309 = vmatpush.msra.mxu0 %v254
  %310 = vmatpush.msra.mxu0 %v251
  %311 = vmatpush.msra.mxu0 %v248
  %312 = vmatpush.msra.mxu0 %v245
  %313 = vmatpush.msra.mxu0 %v242
  %314 = vmatmul.f32.gmra.mxu0 %v226
  %v315 = vpop.f32.mrf.mxu0
  %v316 = vadd.f32 %v292, %v315
  %317 = vmatmul.f32.gmra.mxu0 %v227
  %v318 = vpop.f32.mrf.mxu0
  %v319 = vadd.f32 %v292, %v318
  %320 = vmatmul.f32.gmra.mxu0 %v228
  %v321 = vpop.f32.mrf.mxu0
  %v322 = vadd.f32 %v292, %v321
  %323 = vmatmul.f32.gmra.mxu0 %v229
  %v324 = vpop.f32.mrf.mxu0
  %v325 = vadd.f32 %v292, %v324
  %326 = vmatmul.f32.gmra.mxu0 %v230
  %v327 = vpop.f32.mrf.mxu0
  %v328 = vadd.f32 %v292, %v327
  %329 = vmatmul.f32.gmra.mxu0 %v231
  %v330 = vpop.f32.mrf.mxu0
  %v331 = vadd.f32 %v292, %v330
  %332 = vmatmul.f32.gmra.mxu0 %v232
  %v333 = vpop.f32.mrf.mxu0
  %v334 = vadd.f32 %v292, %v333
  %335 = vmatmul.f32.gmra.mxu0 %v233
  %v336 = vpop.f32.mrf.mxu0
  %v337 = vadd.f32 %v292, %v336
  %338 = vmatmul.f32.gmra.mxu0 %v234
  %v339 = vpop.f32.mrf.mxu0
  %v340 = vadd.f32 %v292, %v339
  %341 = vmatmul.f32.gmra.mxu0 %v235
  %v342 = vpop.f32.mrf.mxu0
  %v343 = vadd.f32 %v292, %v342
  %344 = vmatmul.f32.gmra.mxu0 %v236
  %v345 = vpop.f32.mrf.mxu0
  %v346 = vadd.f32 %v292, %v345
  %347 = vmatmul.f32.gmra.mxu0 %v237
  %v348 = vpop.f32.mrf.mxu0
  %v349 = vadd.f32 %v292, %v348
  %350 = vmatmul.f32.gmra.mxu0 %v238
  %v351 = vpop.f32.mrf.mxu0
  %v352 = vadd.f32 %v292, %v351
  %353 = vmatmul.f32.gmra.mxu0 %v239
  %v354 = vpop.f32.mrf.mxu0
  %v355 = vadd.f32 %v292, %v354
  %356 = vmatmul.f32.gmra.mxu0 %v240
  %v357 = vpop.f32.mrf.mxu0
  %v358 = vadd.f32 %v292, %v357
  %359 = vmatmul.f32.gmra.mxu0 %v241
  %v360 = vpop.f32.mrf.mxu0
  %v361 = vadd.f32 %v292, %v360
  %362 = vdwg.mxu0
  %363 = vmatpush.msra.mxu0 %v288
  %364 = vmatpush.msra.mxu0 %v285
  %365 = vmatpush.msra.mxu0 %v282
  %366 = vmatpush.msra.mxu0 %v279
  %367 = vmatpush.msra.mxu0 %v276
  %368 = vmatpush.msra.mxu0 %v273
  %369 = vmatpush.msra.mxu0 %v270
  %370 = vmatpush.msra.mxu0 %v267
  %371 = vmatpush.msra.mxu0 %v264
  %372 = vmatpush.msra.mxu0 %v261
  %373 = vmatpush.msra.mxu0 %v258
  %374 = vmatpush.msra.mxu0 %v255
  %375 = vmatpush.msra.mxu0 %v252
  %376 = vmatpush.msra.mxu0 %v249
  %377 = vmatpush.msra.mxu0 %v246
  %378 = vmatpush.msra.mxu0 %v243
  %379 = vmatmul.f32.gmra.mxu0 %v226
  %v380 = vpop.f32.mrf.mxu0
  %v381 = vadd.f32 %v293, %v380
  %382 = vmatmul.f32.gmra.mxu0 %v227
  %v383 = vpop.f32.mrf.mxu0
  %v384 = vadd.f32 %v293, %v383
  %385 = vmatmul.f32.gmra.mxu0 %v228
  %v386 = vpop.f32.mrf.mxu0
  %v387 = vadd.f32 %v293, %v386
  %388 = vmatmul.f32.gmra.mxu0 %v229
  %v389 = vpop.f32.mrf.mxu0
  %v390 = vadd.f32 %v293, %v389
  %391 = vmatmul.f32.gmra.mxu0 %v230
  %v392 = vpop.f32.mrf.mxu0
  %v393 = vadd.f32 %v293, %v392
  %394 = vmatmul.f32.gmra.mxu0 %v231
  %v395 = vpop.f32.mrf.mxu0
  %v396 = vadd.f32 %v293, %v395
  %397 = vmatmul.f32.gmra.mxu0 %v232
  %v398 = vpop.f32.mrf.mxu0
  %v399 = vadd.f32 %v293, %v398
  %400 = vmatmul.f32.gmra.mxu0 %v233
  %v401 = vpop.f32.mrf.mxu0
  %v402 = vadd.f32 %v293, %v401
  %403 = vmatmul.f32.gmra.mxu0 %v234
  %v404 = vpop.f32.mrf.mxu0
  %v405 = vadd.f32 %v293, %v404
  %406 = vmatmul.f32.gmra.mxu0 %v235
  %v407 = vpop.f32.mrf.mxu0
  %v408 = vadd.f32 %v293, %v407
  %409 = vmatmul.f32.gmra.mxu0 %v236
  %v410 = vpop.f32.mrf.mxu0
  %v411 = vadd.f32 %v293, %v410
  %412 = vmatmul.f32.gmra.mxu0 %v237
  %v413 = vpop.f32.mrf.mxu0
  %v414 = vadd.f32 %v293, %v413
  %415 = vmatmul.f32.gmra.mxu0 %v238
  %v416 = vpop.f32.mrf.mxu0
  %v417 = vadd.f32 %v293, %v416
  %418 = vmatmul.f32.gmra.mxu0 %v239
  %v419 = vpop.f32.mrf.mxu0
  %v420 = vadd.f32 %v293, %v419
  %421 = vmatmul.f32.gmra.mxu0 %v240
  %v422 = vpop.f32.mrf.mxu0
  %v423 = vadd.f32 %v293, %v422
  %424 = vmatmul.f32.gmra.mxu0 %v241
  %v425 = vpop.f32.mrf.mxu0
  %v426 = vadd.f32 %v293, %v425
  %427 = vdwg.mxu0
  %428 = vmatpush.msra.mxu0 %v289
  %429 = vmatpush.msra.mxu0 %v286
  %430 = vmatpush.msra.mxu0 %v283
  %431 = vmatpush.msra.mxu0 %v280
  %432 = vmatpush.msra.mxu0 %v277
  %433 = vmatpush.msra.mxu0 %v274
  %434 = vmatpush.msra.mxu0 %v271
  %435 = vmatpush.msra.mxu0 %v268
  %436 = vmatpush.msra.mxu0 %v265
  %437 = vmatpush.msra.mxu0 %v262
  %438 = vmatpush.msra.mxu0 %v259
  %439 = vmatpush.msra.mxu0 %v256
  %440 = vmatpush.msra.mxu0 %v253
  %441 = vmatpush.msra.mxu0 %v250
  %442 = vmatpush.msra.mxu0 %v247
  %443 = vmatpush.msra.mxu0 %v244
  %444 = vmatmul.f32.gmra.mxu0 %v226
  %v445 = vpop.f32.mrf.mxu0
  %v446 = vadd.f32 %v294, %v445
  %447 = vmatmul.f32.gmra.mxu0 %v227
  %v448 = vpop.f32.mrf.mxu0
  %v449 = vadd.f32 %v294, %v448
  %450 = vmatmul.f32.gmra.mxu0 %v228
  %v451 = vpop.f32.mrf.mxu0
  %v452 = vadd.f32 %v294, %v451
  %453 = vmatmul.f32.gmra.mxu0 %v229
  %v454 = vpop.f32.mrf.mxu0
  %v455 = vadd.f32 %v294, %v454
  %456 = vmatmul.f32.gmra.mxu0 %v230
  %v457 = vpop.f32.mrf.mxu0
  %v458 = vadd.f32 %v294, %v457
  %459 = vmatmul.f32.gmra.mxu0 %v231
  %v460 = vpop.f32.mrf.mxu0
  %v461 = vadd.f32 %v294, %v460
  %462 = vmatmul.f32.gmra.mxu0 %v232
  %v463 = vpop.f32.mrf.mxu0
  %v464 = vadd.f32 %v294, %v463
  %465 = vmatmul.f32.gmra.mxu0 %v233
  %v466 = vpop.f32.mrf.mxu0
  %v467 = vadd.f32 %v294, %v466
  %468 = vmatmul.f32.gmra.mxu0 %v234
  %v469 = vpop.f32.mrf.mxu0
  %v470 = vadd.f32 %v294, %v469
  %471 = vmatmul.f32.gmra.mxu0 %v235
  %v472 = vpop.f32.mrf.mxu0
  %v473 = vadd.f32 %v294, %v472
  %474 = vmatmul.f32.gmra.mxu0 %v236
  %v475 = vpop.f32.mrf.mxu0
  %v476 = vadd.f32 %v294, %v475
  %477 = vmatmul.f32.gmra.mxu0 %v237
  %v478 = vpop.f32.mrf.mxu0
  %v479 = vadd.f32 %v294, %v478
  %480 = vmatmul.f32.gmra.mxu0 %v238
  %v481 = vpop.f32.mrf.mxu0
  %v482 = vadd.f32 %v294, %v481
  %483 = vmatmul.f32.gmra.mxu0 %v239
  %v484 = vpop.f32.mrf.mxu0
  %v485 = vadd.f32 %v294, %v484
  %486 = vmatmul.f32.gmra.mxu0 %v240
  %v487 = vpop.f32.mrf.mxu0
  %v488 = vadd.f32 %v294, %v487
  %489 = vmatmul.f32.gmra.mxu0 %v241
  %v490 = vpop.f32.mrf.mxu0
  %v491 = vadd.f32 %v294, %v490
  %492 = vdwg.mxu0
  %v493 = vld [vmem:[%s0] sm:$0xff]
  %v494 = vld [vmem:[%s0 + $0x8] sm:$0xff]
  %v495 = vld [vmem:[%s0 + $0x10] sm:$0xff]
  %v496 = vld [vmem:[%s0 + $0x18] sm:$0xff]
  %v497 = vld [vmem:[%s0 + $0x20] sm:$0xff]
  %v498 = vld [vmem:[%s0 + $0x28] sm:$0xff]
  %v499 = vld [vmem:[%s0 + $0x30] sm:$0xff]
  %v500 = vld [vmem:[%s0 + $0x38] sm:$0xff]
  %v501 = vld [vmem:[%s0 + $0x40] sm:$0xff]
  %v502 = vld [vmem:[%s0 + $0x48] sm:$0xff]
  %v503 = vld [vmem:[%s0 + $0x50] sm:$0xff]
  %v504 = vld [vmem:[%s0 + $0x58] sm:$0xff]
  %v505 = vld [vmem:[%s0 + $0x60] sm:$0xff]
  %v506 = vld [vmem:[%s0 + $0x68] sm:$0xff]
  %v507 = vld [vmem:[%s0 + $0x70] sm:$0xff]
  %v508 = vld [vmem:[%s0 + $0x78] sm:$0xff]
  %v509 = vld [vmem:[%s6] sm:$0xff]
  %v510 = vld [vmem:[%s6 + $0x8] sm:$0xff]
  %v511 = vld [vmem:[%s6 + $0x10] sm:$0xff]
  %v512 = vld [vmem:[%s6 + $0x18] sm:$0xff]
  %v513 = vld [vmem:[%s6 + $0x20] sm:$0xff]
  %v514 = vld [vmem:[%s6 + $0x28] sm:$0xff]
  %v515 = vld [vmem:[%s6 + $0x30] sm:$0xff]
  %v516 = vld [vmem:[%s6 + $0x38] sm:$0xff]
  %v517 = vld [vmem:[%s6 + $0x40] sm:$0xff]
  %v518 = vld [vmem:[%s6 + $0x48] sm:$0xff]
  %v519 = vld [vmem:[%s6 + $0x50] sm:$0xff]
  %v520 = vld [vmem:[%s6 + $0x58] sm:$0xff]
  %v521 = vld [vmem:[%s6 + $0x60] sm:$0xff]
  %v522 = vld [vmem:[%s6 + $0x68] sm:$0xff]
  %v523 = vld [vmem:[%s6 + $0x70] sm:$0xff]
  %v524 = vld [vmem:[%s6 + $0x78] sm:$0xff]
  %v525 = vld [vmem:[%s7] sm:$0x1]
  %v527 = vperm.slane %v525, 0
  %529 = vmatpush.msra.mxu0 %v524
  %530 = vmatpush.msra.mxu0 %v523
  %531 = vmatpush.msra.mxu0 %v522
  %532 = vmatpush.msra.mxu0 %v521
  %533 = vmatpush.msra.mxu0 %v520
  %534 = vmatpush.msra.mxu0 %v519
  %535 = vmatpush.msra.mxu0 %v518
  %536 = vmatpush.msra.mxu0 %v517
  %537 = vmatpush.msra.mxu0 %v516
  %538 = vmatpush.msra.mxu0 %v515
  %539 = vmatpush.msra.mxu0 %v514
  %540 = vmatpush.msra.mxu0 %v513
  %541 = vmatpush.msra.mxu0 %v512
  %542 = vmatpush.msra.mxu0 %v511
  %543 = vmatpush.msra.mxu0 %v510
  %544 = vmatpush.msra.mxu0 %v509
  %545 = vmatmul.f32.gmra.mxu0 %v493
  %v546 = vpop.f32.mrf.mxu0
  %v547 = vadd.f32 %v527, %v546
  %548 = vmatmul.f32.gmra.mxu0 %v494
  %v549 = vpop.f32.mrf.mxu0
  %v550 = vadd.f32 %v527, %v549
  %551 = vmatmul.f32.gmra.mxu0 %v495
  %v552 = vpop.f32.mrf.mxu0
  %v553 = vadd.f32 %v527, %v552
  %554 = vmatmul.f32.gmra.mxu0 %v496
  %v555 = vpop.f32.mrf.mxu0
  %v556 = vadd.f32 %v527, %v555
  %557 = vmatmul.f32.gmra.mxu0 %v497
  %v558 = vpop.f32.mrf.mxu0
  %v559 = vadd.f32 %v527, %v558
  %560 = vmatmul.f32.gmra.mxu0 %v498
  %v561 = vpop.f32.mrf.mxu0
  %v562 = vadd.f32 %v527, %v561
  %563 = vmatmul.f32.gmra.mxu0 %v499
  %v564 = vpop.f32.mrf.mxu0
  %v565 = vadd.f32 %v527, %v564
  %566 = vmatmul.f32.gmra.mxu0 %v500
  %v567 = vpop.f32.mrf.mxu0
  %v568 = vadd.f32 %v527, %v567
  %569 = vmatmul.f32.gmra.mxu0 %v501
  %v570 = vpop.f32.mrf.mxu0
  %v571 = vadd.f32 %v527, %v570
  %572 = vmatmul.f32.gmra.mxu0 %v502
  %v573 = vpop.f32.mrf.mxu0
  %v574 = vadd.f32 %v527, %v573
  %575 = vmatmul.f32.gmra.mxu0 %v503
  %v576 = vpop.f32.mrf.mxu0
  %v577 = vadd.f32 %v527, %v576
  %578 = vmatmul.f32.gmra.mxu0 %v504
  %v579 = vpop.f32.mrf.mxu0
  %v580 = vadd.f32 %v527, %v579
  %581 = vmatmul.f32.gmra.mxu0 %v505
  %v582 = vpop.f32.mrf.mxu0
  %v583 = vadd.f32 %v527, %v582
  %584 = vmatmul.f32.gmra.mxu0 %v506
  %v585 = vpop.f32.mrf.mxu0
  %v586 = vadd.f32 %v527, %v585
  %587 = vmatmul.f32.gmra.mxu0 %v507
  %v588 = vpop.f32.mrf.mxu0
  %v589 = vadd.f32 %v527, %v588
  %590 = vmatmul.f32.gmra.mxu0 %v508
  %v591 = vpop.f32.mrf.mxu0
  %v592 = vadd.f32 %v527, %v591
  %593 = vdwg.mxu0
  %v594 = vpack.c.bf16 %v550, %v547
  %v595 = vpack.c.bf16 %v556, %v553
  %v596 = vpack.c.bf16 %v562, %v559
  %v597 = vpack.c.bf16 %v568, %v565
  %v598 = vpack.c.bf16 %v574, %v571
  %v599 = vpack.c.bf16 %v580, %v577
  %v600 = vpack.c.bf16 %v586, %v583
  %v601 = vpack.c.bf16 %v592, %v589
  %v618 = vunpack.c.l.b16 %v82
  %v619 = vunpack.c.l.b16 %v83
  %v620 = vunpack.c.l.b16 %v84
  %v621 = vunpack.c.l.b16 %v85
  %v622 = vunpack.c.l.b16 %v86
  %v623 = vunpack.c.l.b16 %v87
  %v624 = vunpack.c.l.b16 %v88
  %v625 = vunpack.c.l.b16 %v89
  %v626 = vunpack.c.l.b16 %v90
  %v627 = vunpack.c.l.b16 %v91
  %v628 = vunpack.c.l.b16 %v92
  %v629 = vunpack.c.l.b16 %v93
  %v630 = vunpack.c.l.b16 %v94
  %v631 = vunpack.c.l.b16 %v95
  %v632 = vunpack.c.l.b16 %v96
  %v633 = vunpack.c.l.b16 %v97
  %v634 = vpack.c.b16 %v619, %v618
  %v635 = vpack.c.b16 %v621, %v620
  %v636 = vpack.c.b16 %v623, %v622
  %v637 = vpack.c.b16 %v625, %v624
  %v638 = vpack.c.b16 %v627, %v626
  %v639 = vpack.c.b16 %v629, %v628
  %v640 = vpack.c.b16 %v631, %v630
  %v641 = vpack.c.b16 %v633, %v632
  %650 = vmatpush.bf16.msra.mxu0 %v601
  %651 = vmatpush.bf16.msra.mxu0 %v600
  %652 = vmatpush.bf16.msra.mxu0 %v599
  %653 = vmatpush.bf16.msra.mxu0 %v598
  %654 = vmatpush.bf16.msra.mxu0 %v597
  %655 = vmatpush.bf16.msra.mxu0 %v596
  %656 = vmatpush.bf16.msra.mxu0 %v595
  %657 = vmatpush.bf16.msra.mxu0 %v594
  %658 = vmatmul.bf16.gmra.mxu0 %v634
  %v659 = vpop.f32.mrf.mxu0
  %v660 = vadd.f32 %v316, %v659
  %v661 = vpop.f32.mrf.mxu0
  %v662 = vadd.f32 %v319, %v661
  %663 = vmatmul.bf16.gmra.mxu0 %v635
  %v664 = vpop.f32.mrf.mxu0
  %v665 = vadd.f32 %v322, %v664
  %v666 = vpop.f32.mrf.mxu0
  %v667 = vadd.f32 %v325, %v666
  %668 = vmatmul.bf16.gmra.mxu0 %v636
  %v669 = vpop.f32.mrf.mxu0
  %v670 = vadd.f32 %v328, %v669
  %v671 = vpop.f32.mrf.mxu0
  %v672 = vadd.f32 %v331, %v671
  %673 = vmatmul.bf16.gmra.mxu0 %v637
  %v674 = vpop.f32.mrf.mxu0
  %v675 = vadd.f32 %v334, %v674
  %v676 = vpop.f32.mrf.mxu0
  %v677 = vadd.f32 %v337, %v676
  %678 = vmatmul.bf16.gmra.mxu0 %v638
  %v679 = vpop.f32.mrf.mxu0
  %v680 = vadd.f32 %v340, %v679
  %v681 = vpop.f32.mrf.mxu0
  %v682 = vadd.f32 %v343, %v681
  %683 = vmatmul.bf16.gmra.mxu0 %v639
  %v684 = vpop.f32.mrf.mxu0
  %v685 = vadd.f32 %v346, %v684
  %v686 = vpop.f32.mrf.mxu0
  %v687 = vadd.f32 %v349, %v686
  %688 = vmatmul.bf16.gmra.mxu0 %v640
  %v689 = vpop.f32.mrf.mxu0
  %v690 = vadd.f32 %v352, %v689
  %v691 = vpop.f32.mrf.mxu0
  %v692 = vadd.f32 %v355, %v691
  %693 = vmatmul.bf16.gmra.mxu0 %v641
  %v694 = vpop.f32.mrf.mxu0
  %v695 = vadd.f32 %v358, %v694
  %v696 = vpop.f32.mrf.mxu0
  %v697 = vadd.f32 %v361, %v696
  %698 = vdwg.mxu0
  %v699 = vmax.f32 %v660, 0.0
  %v700 = vmax.f32 %v662, 0.0
  %v701 = vmax.f32 %v665, 0.0
  %v702 = vmax.f32 %v667, 0.0
  %v703 = vmax.f32 %v670, 0.0
  %v704 = vmax.f32 %v672, 0.0
  %v705 = vmax.f32 %v675, 0.0
  %v706 = vmax.f32 %v677, 0.0
  %v707 = vmax.f32 %v680, 0.0
  %v708 = vmax.f32 %v682, 0.0
  %v709 = vmax.f32 %v685, 0.0
  %v710 = vmax.f32 %v687, 0.0
  %v711 = vmax.f32 %v690, 0.0
  %v712 = vmax.f32 %v692, 0.0
  %v713 = vmax.f32 %v695, 0.0
  %v714 = vmax.f32 %v697, 0.0
  %716 = vset.pattern.permute.xlu0 0
  %717 = vperm.xlu0 %716, %v114
  %v718 = vpop.permute.xlu0 %717
  %721 = vset.pattern.permute.xlu0 0
  %722 = vperm.xlu0 %721, %v115
  %v723 = vpop.permute.xlu0 %722
  %726 = vset.pattern.permute.xlu0 0
  %727 = vperm.xlu0 %726, %v116
  %v728 = vpop.permute.xlu0 %727
  %731 = vset.pattern.permute.xlu0 0
  %732 = vperm.xlu0 %731, %v117
  %v733 = vpop.permute.xlu0 %732
  %736 = vset.pattern.permute.xlu0 0
  %737 = vperm.xlu0 %736, %v118
  %v738 = vpop.permute.xlu0 %737
  %741 = vset.pattern.permute.xlu0 0
  %742 = vperm.xlu0 %741, %v119
  %v743 = vpop.permute.xlu0 %742
  %746 = vset.pattern.permute.xlu0 0
  %747 = vperm.xlu0 %746, %v120
  %v748 = vpop.permute.xlu0 %747
  %751 = vset.pattern.permute.xlu0 0
  %752 = vperm.xlu0 %751, %v121
  %v753 = vpop.permute.xlu0 %752
  %756 = vset.pattern.permute.xlu0 0
  %757 = vperm.xlu0 %756, %v122
  %v758 = vpop.permute.xlu0 %757
  %761 = vset.pattern.permute.xlu0 0
  %762 = vperm.xlu0 %761, %v123
  %v763 = vpop.permute.xlu0 %762
  %766 = vset.pattern.permute.xlu0 0
  %767 = vperm.xlu0 %766, %v124
  %v768 = vpop.permute.xlu0 %767
  %771 = vset.pattern.permute.xlu0 0
  %772 = vperm.xlu0 %771, %v125
  %v773 = vpop.permute.xlu0 %772
  %776 = vset.pattern.permute.xlu0 0
  %777 = vperm.xlu0 %776, %v126
  %v778 = vpop.permute.xlu0 %777
  %781 = vset.pattern.permute.xlu0 0
  %782 = vperm.xlu0 %781, %v127
  %v783 = vpop.permute.xlu0 %782
  %786 = vset.pattern.permute.xlu0 0
  %787 = vperm.xlu0 %786, %v128
  %v788 = vpop.permute.xlu0 %787
  %791 = vset.pattern.permute.xlu0 0
  %792 = vperm.xlu0 %791, %v129
  %v793 = vpop.permute.xlu0 %792
  %v795 = vmul.f32 %v718, %v699
  %v796 = vmul.f32 %v723, %v700
  %v797 = vmul.f32 %v728, %v701
  %v798 = vmul.f32 %v733, %v702
  %v799 = vmul.f32 %v738, %v703
  %v800 = vmul.f32 %v743, %v704
  %v801 = vmul.f32 %v748, %v705
  %v802 = vmul.f32 %v753, %v706
  %v803 = vmul.f32 %v758, %v707
  %v804 = vmul.f32 %v763, %v708
  %v805 = vmul.f32 %v768, %v709
  %v806 = vmul.f32 %v773, %v710
  %v807 = vmul.f32 %v778, %v711
  %v808 = vmul.f32 %v783, %v712
  %v809 = vmul.f32 %v788, %v713
  %v810 = vmul.f32 %v793, %v714
  %v811 = vpack.c.bf16 %v796, %v795
  %v812 = vpack.c.bf16 %v798, %v797
  %v813 = vpack.c.bf16 %v800, %v799
  %v814 = vpack.c.bf16 %v802, %v801
  %v815 = vpack.c.bf16 %v804, %v803
  %v816 = vpack.c.bf16 %v806, %v805
  %v817 = vpack.c.bf16 %v808, %v807
  %v818 = vpack.c.bf16 %v810, %v809
  %v819 = vld [vmem:[%s10] sm:$0x1]
  %v821 = vperm.slane %v819, 0
  %v823 = vadd.f32 %v547, %v821
  %v824 = vadd.f32 %v550, %v821
  %v825 = vadd.f32 %v553, %v821
  %v826 = vadd.f32 %v556, %v821
  %v827 = vadd.f32 %v559, %v821
  %v828 = vadd.f32 %v562, %v821
  %v829 = vadd.f32 %v565, %v821
  %v830 = vadd.f32 %v568, %v821
  %v831 = vadd.f32 %v571, %v821
  %v832 = vadd.f32 %v574, %v821
  %v833 = vadd.f32 %v577, %v821
  %v834 = vadd.f32 %v580, %v821
  %v835 = vadd.f32 %v583, %v821
  %v836 = vadd.f32 %v586, %v821
  %v837 = vadd.f32 %v589, %v821
  %v838 = vadd.f32 %v592, %v821
  %v839 = vmax.f32 %v823, 0.0
  %v840 = vmax.f32 %v824, 0.0
  %v841 = vmax.f32 %v825, 0.0
  %v842 = vmax.f32 %v826, 0.0
  %v843 = vmax.f32 %v827, 0.0
  %v844 = vmax.f32 %v828, 0.0
  %v845 = vmax.f32 %v829, 0.0
  %v846 = vmax.f32 %v830, 0.0
  %v847 = vmax.f32 %v831, 0.0
  %v848 = vmax.f32 %v832, 0.0
  %v849 = vmax.f32 %v833, 0.0
  %v850 = vmax.f32 %v834, 0.0
  %v851 = vmax.f32 %v835, 0.0
  %v852 = vmax.f32 %v836, 0.0
  %v853 = vmax.f32 %v837, 0.0
  %v854 = vmax.f32 %v838, 0.0
  %v855 = vmul.f32 %v839, %v149
  %v856 = vmul.f32 %v840, %v154
  %v857 = vmul.f32 %v841, %v159
  %v858 = vmul.f32 %v842, %v164
  %v859 = vmul.f32 %v843, %v169
  %v860 = vmul.f32 %v844, %v174
  %v861 = vmul.f32 %v845, %v179
  %v862 = vmul.f32 %v846, %v184
  %v863 = vmul.f32 %v847, %v189
  %v864 = vmul.f32 %v848, %v194
  %v865 = vmul.f32 %v849, %v199
  %v866 = vmul.f32 %v850, %v204
  %v867 = vmul.f32 %v851, %v209
  %v868 = vmul.f32 %v852, %v214
  %v869 = vmul.f32 %v853, %v219
  %v870 = vmul.f32 %v854, %v224
  %v887 = vunpack.c.l.b16 %v98
  %v888 = vunpack.c.l.b16 %v99
  %v889 = vunpack.c.l.b16 %v100
  %v890 = vunpack.c.l.b16 %v101
  %v891 = vunpack.c.l.b16 %v102
  %v892 = vunpack.c.l.b16 %v103
  %v893 = vunpack.c.l.b16 %v104
  %v894 = vunpack.c.l.b16 %v105
  %v895 = vunpack.c.l.b16 %v106
  %v896 = vunpack.c.l.b16 %v107
  %v897 = vunpack.c.l.b16 %v108
  %v898 = vunpack.c.l.b16 %v109
  %v899 = vunpack.c.l.b16 %v110
  %v900 = vunpack.c.l.b16 %v111
  %v901 = vunpack.c.l.b16 %v112
  %v902 = vunpack.c.l.b16 %v113
  %v903 = vpack.c.b16 %v888, %v887
  %v904 = vpack.c.b16 %v890, %v889
  %v905 = vpack.c.b16 %v892, %v891
  %v906 = vpack.c.b16 %v894, %v893
  %v907 = vpack.c.b16 %v896, %v895
  %v908 = vpack.c.b16 %v898, %v897
  %v909 = vpack.c.b16 %v900, %v899
  %v910 = vpack.c.b16 %v902, %v901
  %919 = vmatpush.bf16.msra.mxu0 %v818
  %920 = vmatpush.bf16.msra.mxu0 %v817
  %921 = vmatpush.bf16.msra.mxu0 %v816
  %922 = vmatpush.bf16.msra.mxu0 %v815
  %923 = vmatpush.bf16.msra.mxu0 %v814
  %924 = vmatpush.bf16.msra.mxu0 %v813
  %925 = vmatpush.bf16.msra.mxu0 %v812
  %926 = vmatpush.bf16.msra.mxu0 %v811
  %927 = vmatmul.bf16.gmra.mxu0 %v903
  %v928 = vpop.f32.mrf.mxu0
  %v929 = vadd.f32 %v855, %v928
  %v930 = vpop.f32.mrf.mxu0
  %v931 = vadd.f32 %v856, %v930
  %932 = vmatmul.bf16.gmra.mxu0 %v904
  %v933 = vpop.f32.mrf.mxu0
  %v934 = vadd.f32 %v857, %v933
  %v935 = vpop.f32.mrf.mxu0
  %v936 = vadd.f32 %v858, %v935
  %937 = vmatmul.bf16.gmra.mxu0 %v905
  %v938 = vpop.f32.mrf.mxu0
  %v939 = vadd.f32 %v859, %v938
  %v940 = vpop.f32.mrf.mxu0
  %v941 = vadd.f32 %v860, %v940
  %942 = vmatmul.bf16.gmra.mxu0 %v906
  %v943 = vpop.f32.mrf.mxu0
  %v944 = vadd.f32 %v861, %v943
  %v945 = vpop.f32.mrf.mxu0
  %v946 = vadd.f32 %v862, %v945
  %947 = vmatmul.bf16.gmra.mxu0 %v907
  %v948 = vpop.f32.mrf.mxu0
  %v949 = vadd.f32 %v863, %v948
  %v950 = vpop.f32.mrf.mxu0
  %v951 = vadd.f32 %v864, %v950
  %952 = vmatmul.bf16.gmra.mxu0 %v908
  %v953 = vpop.f32.mrf.mxu0
  %v954 = vadd.f32 %v865, %v953
  %v955 = vpop.f32.mrf.mxu0
  %v956 = vadd.f32 %v866, %v955
  %957 = vmatmul.bf16.gmra.mxu0 %v909
  %v958 = vpop.f32.mrf.mxu0
  %v959 = vadd.f32 %v867, %v958
  %v960 = vpop.f32.mrf.mxu0
  %v961 = vadd.f32 %v868, %v960
  %962 = vmatmul.bf16.gmra.mxu0 %v910
  %v963 = vpop.f32.mrf.mxu0
  %v964 = vadd.f32 %v869, %v963
  %v965 = vpop.f32.mrf.mxu0
  %v966 = vadd.f32 %v870, %v965
  %967 = vdwg.mxu0
  %v968 = vmax.f32 %v929, 0.0
  %v969 = vmax.f32 %v931, 0.0
  %v970 = vmax.f32 %v934, 0.0
  %v971 = vmax.f32 %v936, 0.0
  %v972 = vmax.f32 %v939, 0.0
  %v973 = vmax.f32 %v941, 0.0
  %v974 = vmax.f32 %v944, 0.0
  %v975 = vmax.f32 %v946, 0.0
  %v976 = vmax.f32 %v949, 0.0
  %v977 = vmax.f32 %v951, 0.0
  %v978 = vmax.f32 %v954, 0.0
  %v979 = vmax.f32 %v956, 0.0
  %v980 = vmax.f32 %v959, 0.0
  %v981 = vmax.f32 %v961, 0.0
  %v982 = vmax.f32 %v964, 0.0
  %v983 = vmax.f32 %v966, 0.0
  %984 = vst [vmem:[#allocation2 + $0x8] sm:$0xff] %v968
  %985 = vst [vmem:[#allocation2 + $0x28] sm:$0xff] %v969
  %986 = vst [vmem:[#allocation2 + $0x48] sm:$0xff] %v970
  %987 = vst [vmem:[#allocation2 + $0x68] sm:$0xff] %v971
  %988 = vst [vmem:[#allocation2 + $0x88] sm:$0xff] %v972
  %989 = vst [vmem:[#allocation2 + $0xa8] sm:$0xff] %v973
  %990 = vst [vmem:[#allocation2 + $0xc8] sm:$0xff] %v974
  %991 = vst [vmem:[#allocation2 + $0xe8] sm:$0xff] %v975
  %992 = vst [vmem:[#allocation2 + $0x108] sm:$0xff] %v976
  %993 = vst [vmem:[#allocation2 + $0x128] sm:$0xff] %v977
  %994 = vst [vmem:[#allocation2 + $0x148] sm:$0xff] %v978
  %995 = vst [vmem:[#allocation2 + $0x168] sm:$0xff] %v979
  %996 = vst [vmem:[#allocation2 + $0x188] sm:$0xff] %v980
  %997 = vst [vmem:[#allocation2 + $0x1a8] sm:$0xff] %v981
  %998 = vst [vmem:[#allocation2 + $0x1c8] sm:$0xff] %v982
  %999 = vst [vmem:[#allocation2 + $0x1e8] sm:$0xff] %v983
  %s1000 = scalar_lea.vmem %s6, 128
  %v1001 = vld [vmem:[%s1000] sm:$0xff]
  %v1002 = vld [vmem:[%s1000 + $0x8] sm:$0xff]
  %v1003 = vld [vmem:[%s1000 + $0x10] sm:$0xff]
  %v1004 = vld [vmem:[%s1000 + $0x18] sm:$0xff]
  %v1005 = vld [vmem:[%s1000 + $0x20] sm:$0xff]
  %v1006 = vld [vmem:[%s1000 + $0x28] sm:$0xff]
  %v1007 = vld [vmem:[%s1000 + $0x30] sm:$0xff]
  %v1008 = vld [vmem:[%s1000 + $0x38] sm:$0xff]
  %v1009 = vld [vmem:[%s1000 + $0x40] sm:$0xff]
  %v1010 = vld [vmem:[%s1000 + $0x48] sm:$0xff]
  %v1011 = vld [vmem:[%s1000 + $0x50] sm:$0xff]
  %v1012 = vld [vmem:[%s1000 + $0x58] sm:$0xff]
  %v1013 = vld [vmem:[%s1000 + $0x60] sm:$0xff]
  %v1014 = vld [vmem:[%s1000 + $0x68] sm:$0xff]
  %v1015 = vld [vmem:[%s1000 + $0x70] sm:$0xff]
  %v1016 = vld [vmem:[%s1000 + $0x78] sm:$0xff]
  %s1017 = scalar_lea.vmem %s7, 1
  %v1018 = vld [vmem:[%s1017] sm:$0x1]
  %v1020 = vperm.slane %v1018, 0
  %1022 = vmatpush.msra.mxu0 %v1016
  %1023 = vmatpush.msra.mxu0 %v1015
  %1024 = vmatpush.msra.mxu0 %v1014
  %1025 = vmatpush.msra.mxu0 %v1013
  %1026 = vmatpush.msra.mxu0 %v1012
  %1027 = vmatpush.msra.mxu0 %v1011
  %1028 = vmatpush.msra.mxu0 %v1010
  %1029 = vmatpush.msra.mxu0 %v1009
  %1030 = vmatpush.msra.mxu0 %v1008
  %1031 = vmatpush.msra.mxu0 %v1007
  %1032 = vmatpush.msra.mxu0 %v1006
  %1033 = vmatpush.msra.mxu0 %v1005
  %1034 = vmatpush.msra.mxu0 %v1004
  %1035 = vmatpush.msra.mxu0 %v1003
  %1036 = vmatpush.msra.mxu0 %v1002
  %1037 = vmatpush.msra.mxu0 %v1001
  %1038 = vmatmul.f32.gmra.mxu0 %v968
  %v1039 = vpop.f32.mrf.mxu0
  %v1040 = vadd.f32 %v1020, %v1039
  %1041 = vmatmul.f32.gmra.mxu0 %v969
  %v1042 = vpop.f32.mrf.mxu0
  %v1043 = vadd.f32 %v1020, %v1042
  %1044 = vmatmul.f32.gmra.mxu0 %v970
  %v1045 = vpop.f32.mrf.mxu0
  %v1046 = vadd.f32 %v1020, %v1045
  %1047 = vmatmul.f32.gmra.mxu0 %v971
  %v1048 = vpop.f32.mrf.mxu0
  %v1049 = vadd.f32 %v1020, %v1048
  %1050 = vmatmul.f32.gmra.mxu0 %v972
  %v1051 = vpop.f32.mrf.mxu0
  %v1052 = vadd.f32 %v1020, %v1051
  %1053 = vmatmul.f32.gmra.mxu0 %v973
  %v1054 = vpop.f32.mrf.mxu0
  %v1055 = vadd.f32 %v1020, %v1054
  %1056 = vmatmul.f32.gmra.mxu0 %v974
  %v1057 = vpop.f32.mrf.mxu0
  %v1058 = vadd.f32 %v1020, %v1057
  %1059 = vmatmul.f32.gmra.mxu0 %v975
  %v1060 = vpop.f32.mrf.mxu0
  %v1061 = vadd.f32 %v1020, %v1060
  %1062 = vmatmul.f32.gmra.mxu0 %v976
  %v1063 = vpop.f32.mrf.mxu0
  %v1064 = vadd.f32 %v1020, %v1063
  %1065 = vmatmul.f32.gmra.mxu0 %v977
  %v1066 = vpop.f32.mrf.mxu0
  %v1067 = vadd.f32 %v1020, %v1066
  %1068 = vmatmul.f32.gmra.mxu0 %v978
  %v1069 = vpop.f32.mrf.mxu0
  %v1070 = vadd.f32 %v1020, %v1069
  %1071 = vmatmul.f32.gmra.mxu0 %v979
  %v1072 = vpop.f32.mrf.mxu0
  %v1073 = vadd.f32 %v1020, %v1072
  %1074 = vmatmul.f32.gmra.mxu0 %v980
  %v1075 = vpop.f32.mrf.mxu0
  %v1076 = vadd.f32 %v1020, %v1075
  %1077 = vmatmul.f32.gmra.mxu0 %v981
  %v1078 = vpop.f32.mrf.mxu0
  %v1079 = vadd.f32 %v1020, %v1078
  %1080 = vmatmul.f32.gmra.mxu0 %v982
  %v1081 = vpop.f32.mrf.mxu0
  %v1082 = vadd.f32 %v1020, %v1081
  %1083 = vmatmul.f32.gmra.mxu0 %v983
  %v1084 = vpop.f32.mrf.mxu0
  %v1085 = vadd.f32 %v1020, %v1084
  %1086 = vdwg.mxu0
  %v1087 = vpack.c.bf16 %v1043, %v1040
  %v1088 = vpack.c.bf16 %v1049, %v1046
  %v1089 = vpack.c.bf16 %v1055, %v1052
  %v1090 = vpack.c.bf16 %v1061, %v1058
  %v1091 = vpack.c.bf16 %v1067, %v1064
  %v1092 = vpack.c.bf16 %v1073, %v1070
  %v1093 = vpack.c.bf16 %v1079, %v1076
  %v1094 = vpack.c.bf16 %v1085, %v1082
  %1095 = vmatpush.bf16.msra.mxu0 %v1094
  %1096 = vmatpush.bf16.msra.mxu0 %v1093
  %1097 = vmatpush.bf16.msra.mxu0 %v1092
  %1098 = vmatpush.bf16.msra.mxu0 %v1091
  %1099 = vmatpush.bf16.msra.mxu0 %v1090
  %1100 = vmatpush.bf16.msra.mxu0 %v1089
  %1101 = vmatpush.bf16.msra.mxu0 %v1088
  %1102 = vmatpush.bf16.msra.mxu0 %v1087
  %1103 = vmatmul.bf16.gmra.mxu0 %v634
  %v1104 = vpop.f32.mrf.mxu0
  %v1105 = vadd.f32 %v381, %v1104
  %v1106 = vpop.f32.mrf.mxu0
  %v1107 = vadd.f32 %v384, %v1106
  %1108 = vmatmul.bf16.gmra.mxu0 %v635
  %v1109 = vpop.f32.mrf.mxu0
  %v1110 = vadd.f32 %v387, %v1109
  %v1111 = vpop.f32.mrf.mxu0
  %v1112 = vadd.f32 %v390, %v1111
  %1113 = vmatmul.bf16.gmra.mxu0 %v636
  %v1114 = vpop.f32.mrf.mxu0
  %v1115 = vadd.f32 %v393, %v1114
  %v1116 = vpop.f32.mrf.mxu0
  %v1117 = vadd.f32 %v396, %v1116
  %1118 = vmatmul.bf16.gmra.mxu0 %v637
  %v1119 = vpop.f32.mrf.mxu0
  %v1120 = vadd.f32 %v399, %v1119
  %v1121 = vpop.f32.mrf.mxu0
  %v1122 = vadd.f32 %v402, %v1121
  %1123 = vmatmul.bf16.gmra.mxu0 %v638
  %v1124 = vpop.f32.mrf.mxu0
  %v1125 = vadd.f32 %v405, %v1124
  %v1126 = vpop.f32.mrf.mxu0
  %v1127 = vadd.f32 %v408, %v1126
  %1128 = vmatmul.bf16.gmra.mxu0 %v639
  %v1129 = vpop.f32.mrf.mxu0
  %v1130 = vadd.f32 %v411, %v1129
  %v1131 = vpop.f32.mrf.mxu0
  %v1132 = vadd.f32 %v414, %v1131
  %1133 = vmatmul.bf16.gmra.mxu0 %v640
  %v1134 = vpop.f32.mrf.mxu0
  %v1135 = vadd.f32 %v417, %v1134
  %v1136 = vpop.f32.mrf.mxu0
  %v1137 = vadd.f32 %v420, %v1136
  %1138 = vmatmul.bf16.gmra.mxu0 %v641
  %v1139 = vpop.f32.mrf.mxu0
  %v1140 = vadd.f32 %v423, %v1139
  %v1141 = vpop.f32.mrf.mxu0
  %v1142 = vadd.f32 %v426, %v1141
  %1143 = vdwg.mxu0
  %v1144 = vmax.f32 %v1105, 0.0
  %v1145 = vmax.f32 %v1107, 0.0
  %v1146 = vmax.f32 %v1110, 0.0
  %v1147 = vmax.f32 %v1112, 0.0
  %v1148 = vmax.f32 %v1115, 0.0
  %v1149 = vmax.f32 %v1117, 0.0
  %v1150 = vmax.f32 %v1120, 0.0
  %v1151 = vmax.f32 %v1122, 0.0
  %v1152 = vmax.f32 %v1125, 0.0
  %v1153 = vmax.f32 %v1127, 0.0
  %v1154 = vmax.f32 %v1130, 0.0
  %v1155 = vmax.f32 %v1132, 0.0
  %v1156 = vmax.f32 %v1135, 0.0
  %v1157 = vmax.f32 %v1137, 0.0
  %v1158 = vmax.f32 %v1140, 0.0
  %v1159 = vmax.f32 %v1142, 0.0
  %v1160 = vmul.f32 %v718, %v1144
  %v1161 = vmul.f32 %v723, %v1145
  %v1162 = vmul.f32 %v728, %v1146
  %v1163 = vmul.f32 %v733, %v1147
  %v1164 = vmul.f32 %v738, %v1148
  %v1165 = vmul.f32 %v743, %v1149
  %v1166 = vmul.f32 %v748, %v1150
  %v1167 = vmul.f32 %v753, %v1151
  %v1168 = vmul.f32 %v758, %v1152
  %v1169 = vmul.f32 %v763, %v1153
  %v1170 = vmul.f32 %v768, %v1154
  %v1171 = vmul.f32 %v773, %v1155
  %v1172 = vmul.f32 %v778, %v1156
  %v1173 = vmul.f32 %v783, %v1157
  %v1174 = vmul.f32 %v788, %v1158
  %v1175 = vmul.f32 %v793, %v1159
  %v1176 = vpack.c.bf16 %v1161, %v1160
  %v1177 = vpack.c.bf16 %v1163, %v1162
  %v1178 = vpack.c.bf16 %v1165, %v1164
  %v1179 = vpack.c.bf16 %v1167, %v1166
  %v1180 = vpack.c.bf16 %v1169, %v1168
  %v1181 = vpack.c.bf16 %v1171, %v1170
  %v1182 = vpack.c.bf16 %v1173, %v1172
  %v1183 = vpack.c.bf16 %v1175, %v1174
  %s1184 = scalar_lea.vmem %s10, 1
  %v1185 = vld [vmem:[%s1184] sm:$0x1]
  %v1187 = vperm.slane %v1185, 0
  %v1189 = vadd.f32 %v1040, %v1187
  %v1190 = vadd.f32 %v1043, %v1187
  %v1191 = vadd.f32 %v1046, %v1187
  %v1192 = vadd.f32 %v1049, %v1187
  %v1193 = vadd.f32 %v1052, %v1187
  %v1194 = vadd.f32 %v1055, %v1187
  %v1195 = vadd.f32 %v1058, %v1187
  %v1196 = vadd.f32 %v1061, %v1187
  %v1197 = vadd.f32 %v1064, %v1187
  %v1198 = vadd.f32 %v1067, %v1187
  %v1199 = vadd.f32 %v1070, %v1187
  %v1200 = vadd.f32 %v1073, %v1187
  %v1201 = vadd.f32 %v1076, %v1187
  %v1202 = vadd.f32 %v1079, %v1187
  %v1203 = vadd.f32 %v1082, %v1187
  %v1204 = vadd.f32 %v1085, %v1187
  %v1205 = vmax.f32 %v1189, 0.0
  %v1206 = vmax.f32 %v1190, 0.0
  %v1207 = vmax.f32 %v1191, 0.0
  %v1208 = vmax.f32 %v1192, 0.0
  %v1209 = vmax.f32 %v1193, 0.0
  %v1210 = vmax.f32 %v1194, 0.0
  %v1211 = vmax.f32 %v1195, 0.0
  %v1212 = vmax.f32 %v1196, 0.0
  %v1213 = vmax.f32 %v1197, 0.0
  %v1214 = vmax.f32 %v1198, 0.0
  %v1215 = vmax.f32 %v1199, 0.0
  %v1216 = vmax.f32 %v1200, 0.0
  %v1217 = vmax.f32 %v1201, 0.0
  %v1218 = vmax.f32 %v1202, 0.0
  %v1219 = vmax.f32 %v1203, 0.0
  %v1220 = vmax.f32 %v1204, 0.0
  %v1221 = vmul.f32 %v1205, %v149
  %v1222 = vmul.f32 %v1206, %v154
  %v1223 = vmul.f32 %v1207, %v159
  %v1224 = vmul.f32 %v1208, %v164
  %v1225 = vmul.f32 %v1209, %v169
  %v1226 = vmul.f32 %v1210, %v174
  %v1227 = vmul.f32 %v1211, %v179
  %v1228 = vmul.f32 %v1212, %v184
  %v1229 = vmul.f32 %v1213, %v189
  %v1230 = vmul.f32 %v1214, %v194
  %v1231 = vmul.f32 %v1215, %v199
  %v1232 = vmul.f32 %v1216, %v204
  %v1233 = vmul.f32 %v1217, %v209
  %v1234 = vmul.f32 %v1218, %v214
  %v1235 = vmul.f32 %v1219, %v219
  %v1236 = vmul.f32 %v1220, %v224
  %1237 = vmatpush.bf16.msra.mxu0 %v1183
  %1238 = vmatpush.bf16.msra.mxu0 %v1182
  %1239 = vmatpush.bf16.msra.mxu0 %v1181
  %1240 = vmatpush.bf16.msra.mxu0 %v1180
  %1241 = vmatpush.bf16.msra.mxu0 %v1179
  %1242 = vmatpush.bf16.msra.mxu0 %v1178
  %1243 = vmatpush.bf16.msra.mxu0 %v1177
  %1244 = vmatpush.bf16.msra.mxu0 %v1176
  %1245 = vmatmul.bf16.gmra.mxu0 %v903
  %v1246 = vpop.f32.mrf.mxu0
  %v1247 = vadd.f32 %v1221, %v1246
  %v1248 = vpop.f32.mrf.mxu0
  %v1249 = vadd.f32 %v1222, %v1248
  %1250 = vmatmul.bf16.gmra.mxu0 %v904
  %v1251 = vpop.f32.mrf.mxu0
  %v1252 = vadd.f32 %v1223, %v1251
  %v1253 = vpop.f32.mrf.mxu0
  %v1254 = vadd.f32 %v1224, %v1253
  %1255 = vmatmul.bf16.gmra.mxu0 %v905
  %v1256 = vpop.f32.mrf.mxu0
  %v1257 = vadd.f32 %v1225, %v1256
  %v1258 = vpop.f32.mrf.mxu0
  %v1259 = vadd.f32 %v1226, %v1258
  %1260 = vmatmul.bf16.gmra.mxu0 %v906
  %v1261 = vpop.f32.mrf.mxu0
  %v1262 = vadd.f32 %v1227, %v1261
  %v1263 = vpop.f32.mrf.mxu0
  %v1264 = vadd.f32 %v1228, %v1263
  %1265 = vmatmul.bf16.gmra.mxu0 %v907
  %v1266 = vpop.f32.mrf.mxu0
  %v1267 = vadd.f32 %v1229, %v1266
  %v1268 = vpop.f32.mrf.mxu0
  %v1269 = vadd.f32 %v1230, %v1268
  %1270 = vmatmul.bf16.gmra.mxu0 %v908
  %v1271 = vpop.f32.mrf.mxu0
  %v1272 = vadd.f32 %v1231, %v1271
  %v1273 = vpop.f32.mrf.mxu0
  %v1274 = vadd.f32 %v1232, %v1273
  %1275 = vmatmul.bf16.gmra.mxu0 %v909
  %v1276 = vpop.f32.mrf.mxu0
  %v1277 = vadd.f32 %v1233, %v1276
  %v1278 = vpop.f32.mrf.mxu0
  %v1279 = vadd.f32 %v1234, %v1278
  %1280 = vmatmul.bf16.gmra.mxu0 %v910
  %v1281 = vpop.f32.mrf.mxu0
  %v1282 = vadd.f32 %v1235, %v1281
  %v1283 = vpop.f32.mrf.mxu0
  %v1284 = vadd.f32 %v1236, %v1283
  %1285 = vdwg.mxu0
  %v1286 = vmax.f32 %v1247, 0.0
  %v1287 = vmax.f32 %v1249, 0.0
  %v1288 = vmax.f32 %v1252, 0.0
  %v1289 = vmax.f32 %v1254, 0.0
  %v1290 = vmax.f32 %v1257, 0.0
  %v1291 = vmax.f32 %v1259, 0.0
  %v1292 = vmax.f32 %v1262, 0.0
  %v1293 = vmax.f32 %v1264, 0.0
  %v1294 = vmax.f32 %v1267, 0.0
  %v1295 = vmax.f32 %v1269, 0.0
  %v1296 = vmax.f32 %v1272, 0.0
  %v1297 = vmax.f32 %v1274, 0.0
  %v1298 = vmax.f32 %v1277, 0.0
  %v1299 = vmax.f32 %v1279, 0.0
  %v1300 = vmax.f32 %v1282, 0.0
  %v1301 = vmax.f32 %v1284, 0.0
  %1302 = vst [vmem:[#allocation2 + $0x10] sm:$0xff] %v1286
  %1303 = vst [vmem:[#allocation2 + $0x30] sm:$0xff] %v1287
  %1304 = vst [vmem:[#allocation2 + $0x50] sm:$0xff] %v1288
  %1305 = vst [vmem:[#allocation2 + $0x70] sm:$0xff] %v1289
  %1306 = vst [vmem:[#allocation2 + $0x90] sm:$0xff] %v1290
  %1307 = vst [vmem:[#allocation2 + $0xb0] sm:$0xff] %v1291
  %1308 = vst [vmem:[#allocation2 + $0xd0] sm:$0xff] %v1292
  %1309 = vst [vmem:[#allocation2 + $0xf0] sm:$0xff] %v1293
  %1310 = vst [vmem:[#allocation2 + $0x110] sm:$0xff] %v1294
  %1311 = vst [vmem:[#allocation2 + $0x130] sm:$0xff] %v1295
  %1312 = vst [vmem:[#allocation2 + $0x150] sm:$0xff] %v1296
  %1313 = vst [vmem:[#allocation2 + $0x170] sm:$0xff] %v1297
  %1314 = vst [vmem:[#allocation2 + $0x190] sm:$0xff] %v1298
  %1315 = vst [vmem:[#allocation2 + $0x1b0] sm:$0xff] %v1299
  %1316 = vst [vmem:[#allocation2 + $0x1d0] sm:$0xff] %v1300
  %1317 = vst [vmem:[#allocation2 + $0x1f0] sm:$0xff] %v1301
  %s1318 = scalar_lea.vmem %s6, 256
  %v1319 = vld [vmem:[%s1318] sm:$0xff]
  %v1320 = vld [vmem:[%s1318 + $0x8] sm:$0xff]
  %v1321 = vld [vmem:[%s1318 + $0x10] sm:$0xff]
  %v1322 = vld [vmem:[%s1318 + $0x18] sm:$0xff]
  %v1323 = vld [vmem:[%s1318 + $0x20] sm:$0xff]
  %v1324 = vld [vmem:[%s1318 + $0x28] sm:$0xff]
  %v1325 = vld [vmem:[%s1318 + $0x30] sm:$0xff]
  %v1326 = vld [vmem:[%s1318 + $0x38] sm:$0xff]
  %v1327 = vld [vmem:[%s1318 + $0x40] sm:$0xff]
  %v1328 = vld [vmem:[%s1318 + $0x48] sm:$0xff]
  %v1329 = vld [vmem:[%s1318 + $0x50] sm:$0xff]
  %v1330 = vld [vmem:[%s1318 + $0x58] sm:$0xff]
  %v1331 = vld [vmem:[%s1318 + $0x60] sm:$0xff]
  %v1332 = vld [vmem:[%s1318 + $0x68] sm:$0xff]
  %v1333 = vld [vmem:[%s1318 + $0x70] sm:$0xff]
  %v1334 = vld [vmem:[%s1318 + $0x78] sm:$0xff]
  %s1335 = scalar_lea.vmem %s7, 2
  %v1336 = vld [vmem:[%s1335] sm:$0x1]
  %v1338 = vperm.slane %v1336, 0
  %1340 = vmatpush.msra.mxu0 %v1334
  %1341 = vmatpush.msra.mxu0 %v1333
  %1342 = vmatpush.msra.mxu0 %v1332
  %1343 = vmatpush.msra.mxu0 %v1331
  %1344 = vmatpush.msra.mxu0 %v1330
  %1345 = vmatpush.msra.mxu0 %v1329
  %1346 = vmatpush.msra.mxu0 %v1328
  %1347 = vmatpush.msra.mxu0 %v1327
  %1348 = vmatpush.msra.mxu0 %v1326
  %1349 = vmatpush.msra.mxu0 %v1325
  %1350 = vmatpush.msra.mxu0 %v1324
  %1351 = vmatpush.msra.mxu0 %v1323
  %1352 = vmatpush.msra.mxu0 %v1322
  %1353 = vmatpush.msra.mxu0 %v1321
  %1354 = vmatpush.msra.mxu0 %v1320
  %1355 = vmatpush.msra.mxu0 %v1319
  %1356 = vmatmul.f32.gmra.mxu0 %v1286
  %v1357 = vpop.f32.mrf.mxu0
  %v1358 = vadd.f32 %v1338, %v1357
  %1359 = vmatmul.f32.gmra.mxu0 %v1287
  %v1360 = vpop.f32.mrf.mxu0
  %v1361 = vadd.f32 %v1338, %v1360
  %1362 = vmatmul.f32.gmra.mxu0 %v1288
  %v1363 = vpop.f32.mrf.mxu0
  %v1364 = vadd.f32 %v1338, %v1363
  %1365 = vmatmul.f32.gmra.mxu0 %v1289
  %v1366 = vpop.f32.mrf.mxu0
  %v1367 = vadd.f32 %v1338, %v1366
  %1368 = vmatmul.f32.gmra.mxu0 %v1290
  %v1369 = vpop.f32.mrf.mxu0
  %v1370 = vadd.f32 %v1338, %v1369
  %1371 = vmatmul.f32.gmra.mxu0 %v1291
  %v1372 = vpop.f32.mrf.mxu0
  %v1373 = vadd.f32 %v1338, %v1372
  %1374 = vmatmul.f32.gmra.mxu0 %v1292
  %v1375 = vpop.f32.mrf.mxu0
  %v1376 = vadd.f32 %v1338, %v1375
  %1377 = vmatmul.f32.gmra.mxu0 %v1293
  %v1378 = vpop.f32.mrf.mxu0
  %v1379 = vadd.f32 %v1338, %v1378
  %1380 = vmatmul.f32.gmra.mxu0 %v1294
  %v1381 = vpop.f32.mrf.mxu0
  %v1382 = vadd.f32 %v1338, %v1381
  %1383 = vmatmul.f32.gmra.mxu0 %v1295
  %v1384 = vpop.f32.mrf.mxu0
  %v1385 = vadd.f32 %v1338, %v1384
  %1386 = vmatmul.f32.gmra.mxu0 %v1296
  %v1387 = vpop.f32.mrf.mxu0
  %v1388 = vadd.f32 %v1338, %v1387
  %1389 = vmatmul.f32.gmra.mxu0 %v1297
  %v1390 = vpop.f32.mrf.mxu0
  %v1391 = vadd.f32 %v1338, %v1390
  %1392 = vmatmul.f32.gmra.mxu0 %v1298
  %v1393 = vpop.f32.mrf.mxu0
  %v1394 = vadd.f32 %v1338, %v1393
  %1395 = vmatmul.f32.gmra.mxu0 %v1299
  %v1396 = vpop.f32.mrf.mxu0
  %v1397 = vadd.f32 %v1338, %v1396
  %1398 = vmatmul.f32.gmra.mxu0 %v1300
  %v1399 = vpop.f32.mrf.mxu0
  %v1400 = vadd.f32 %v1338, %v1399
  %1401 = vmatmul.f32.gmra.mxu0 %v1301
  %v1402 = vpop.f32.mrf.mxu0
  %v1403 = vadd.f32 %v1338, %v1402
  %1404 = vdwg.mxu0
  %v1405 = vpack.c.bf16 %v1361, %v1358
  %v1406 = vpack.c.bf16 %v1367, %v1364
  %v1407 = vpack.c.bf16 %v1373, %v1370
  %v1408 = vpack.c.bf16 %v1379, %v1376
  %v1409 = vpack.c.bf16 %v1385, %v1382
  %v1410 = vpack.c.bf16 %v1391, %v1388
  %v1411 = vpack.c.bf16 %v1397, %v1394
  %v1412 = vpack.c.bf16 %v1403, %v1400
  %1413 = vmatpush.bf16.msra.mxu0 %v1412
  %1414 = vmatpush.bf16.msra.mxu0 %v1411
  %1415 = vmatpush.bf16.msra.mxu0 %v1410
  %1416 = vmatpush.bf16.msra.mxu0 %v1409
  %1417 = vmatpush.bf16.msra.mxu0 %v1408
  %1418 = vmatpush.bf16.msra.mxu0 %v1407
  %1419 = vmatpush.bf16.msra.mxu0 %v1406
  %1420 = vmatpush.bf16.msra.mxu0 %v1405
  %1421 = vmatmul.bf16.gmra.mxu0 %v634
  %v1422 = vpop.f32.mrf.mxu0
  %v1423 = vadd.f32 %v446, %v1422
  %v1424 = vpop.f32.mrf.mxu0
  %v1425 = vadd.f32 %v449, %v1424
  %1426 = vmatmul.bf16.gmra.mxu0 %v635
  %v1427 = vpop.f32.mrf.mxu0
  %v1428 = vadd.f32 %v452, %v1427
  %v1429 = vpop.f32.mrf.mxu0
  %v1430 = vadd.f32 %v455, %v1429
  %1431 = vmatmul.bf16.gmra.mxu0 %v636
  %v1432 = vpop.f32.mrf.mxu0
  %v1433 = vadd.f32 %v458, %v1432
  %v1434 = vpop.f32.mrf.mxu0
  %v1435 = vadd.f32 %v461, %v1434
  %1436 = vmatmul.bf16.gmra.mxu0 %v637
  %v1437 = vpop.f32.mrf.mxu0
  %v1438 = vadd.f32 %v464, %v1437
  %v1439 = vpop.f32.mrf.mxu0
  %v1440 = vadd.f32 %v467, %v1439
  %1441 = vmatmul.bf16.gmra.mxu0 %v638
  %v1442 = vpop.f32.mrf.mxu0
  %v1443 = vadd.f32 %v470, %v1442
  %v1444 = vpop.f32.mrf.mxu0
  %v1445 = vadd.f32 %v473, %v1444
  %1446 = vmatmul.bf16.gmra.mxu0 %v639
  %v1447 = vpop.f32.mrf.mxu0
  %v1448 = vadd.f32 %v476, %v1447
  %v1449 = vpop.f32.mrf.mxu0
  %v1450 = vadd.f32 %v479, %v1449
  %1451 = vmatmul.bf16.gmra.mxu0 %v640
  %v1452 = vpop.f32.mrf.mxu0
  %v1453 = vadd.f32 %v482, %v1452
  %v1454 = vpop.f32.mrf.mxu0
  %v1455 = vadd.f32 %v485, %v1454
  %1456 = vmatmul.bf16.gmra.mxu0 %v641
  %v1457 = vpop.f32.mrf.mxu0
  %v1458 = vadd.f32 %v488, %v1457
  %v1459 = vpop.f32.mrf.mxu0
  %v1460 = vadd.f32 %v491, %v1459
  %1461 = vdwg.mxu0
  %v1462 = vmax.f32 %v1423, 0.0
  %v1463 = vmax.f32 %v1425, 0.0
  %v1464 = vmax.f32 %v1428, 0.0
  %v1465 = vmax.f32 %v1430, 0.0
  %v1466 = vmax.f32 %v1433, 0.0
  %v1467 = vmax.f32 %v1435, 0.0
  %v1468 = vmax.f32 %v1438, 0.0
  %v1469 = vmax.f32 %v1440, 0.0
  %v1470 = vmax.f32 %v1443, 0.0
  %v1471 = vmax.f32 %v1445, 0.0
  %v1472 = vmax.f32 %v1448, 0.0
  %v1473 = vmax.f32 %v1450, 0.0
  %v1474 = vmax.f32 %v1453, 0.0
  %v1475 = vmax.f32 %v1455, 0.0
  %v1476 = vmax.f32 %v1458, 0.0
  %v1477 = vmax.f32 %v1460, 0.0
  %v1478 = vmul.f32 %v718, %v1462
  %v1479 = vmul.f32 %v723, %v1463
  %v1480 = vmul.f32 %v728, %v1464
  %v1481 = vmul.f32 %v733, %v1465
  %v1482 = vmul.f32 %v738, %v1466
  %v1483 = vmul.f32 %v743, %v1467
  %v1484 = vmul.f32 %v748, %v1468
  %v1485 = vmul.f32 %v753, %v1469
  %v1486 = vmul.f32 %v758, %v1470
  %v1487 = vmul.f32 %v763, %v1471
  %v1488 = vmul.f32 %v768, %v1472
  %v1489 = vmul.f32 %v773, %v1473
  %v1490 = vmul.f32 %v778, %v1474
  %v1491 = vmul.f32 %v783, %v1475
  %v1492 = vmul.f32 %v788, %v1476
  %v1493 = vmul.f32 %v793, %v1477
  %v1494 = vpack.c.bf16 %v1479, %v1478
  %v1495 = vpack.c.bf16 %v1481, %v1480
  %v1496 = vpack.c.bf16 %v1483, %v1482
  %v1497 = vpack.c.bf16 %v1485, %v1484
  %v1498 = vpack.c.bf16 %v1487, %v1486
  %v1499 = vpack.c.bf16 %v1489, %v1488
  %v1500 = vpack.c.bf16 %v1491, %v1490
  %v1501 = vpack.c.bf16 %v1493, %v1492
  %s1502 = scalar_lea.vmem %s10, 2
  %v1503 = vld [vmem:[%s1502] sm:$0x1]
  %v1505 = vperm.slane %v1503, 0
  %v1507 = vadd.f32 %v1358, %v1505
  %v1508 = vadd.f32 %v1361, %v1505
  %v1509 = vadd.f32 %v1364, %v1505
  %v1510 = vadd.f32 %v1367, %v1505
  %v1511 = vadd.f32 %v1370, %v1505
  %v1512 = vadd.f32 %v1373, %v1505
  %v1513 = vadd.f32 %v1376, %v1505
  %v1514 = vadd.f32 %v1379, %v1505
  %v1515 = vadd.f32 %v1382, %v1505
  %v1516 = vadd.f32 %v1385, %v1505
  %v1517 = vadd.f32 %v1388, %v1505
  %v1518 = vadd.f32 %v1391, %v1505
  %v1519 = vadd.f32 %v1394, %v1505
  %v1520 = vadd.f32 %v1397, %v1505
  %v1521 = vadd.f32 %v1400, %v1505
  %v1522 = vadd.f32 %v1403, %v1505
  %v1523 = vmax.f32 %v1507, 0.0
  %v1524 = vmax.f32 %v1508, 0.0
  %v1525 = vmax.f32 %v1509, 0.0
  %v1526 = vmax.f32 %v1510, 0.0
  %v1527 = vmax.f32 %v1511, 0.0
  %v1528 = vmax.f32 %v1512, 0.0
  %v1529 = vmax.f32 %v1513, 0.0
  %v1530 = vmax.f32 %v1514, 0.0
  %v1531 = vmax.f32 %v1515, 0.0
  %v1532 = vmax.f32 %v1516, 0.0
  %v1533 = vmax.f32 %v1517, 0.0
  %v1534 = vmax.f32 %v1518, 0.0
  %v1535 = vmax.f32 %v1519, 0.0
  %v1536 = vmax.f32 %v1520, 0.0
  %v1537 = vmax.f32 %v1521, 0.0
  %v1538 = vmax.f32 %v1522, 0.0
  %v1539 = vmul.f32 %v1523, %v149
  %v1540 = vmul.f32 %v1524, %v154
  %v1541 = vmul.f32 %v1525, %v159
  %v1542 = vmul.f32 %v1526, %v164
  %v1543 = vmul.f32 %v1527, %v169
  %v1544 = vmul.f32 %v1528, %v174
  %v1545 = vmul.f32 %v1529, %v179
  %v1546 = vmul.f32 %v1530, %v184
  %v1547 = vmul.f32 %v1531, %v189
  %v1548 = vmul.f32 %v1532, %v194
  %v1549 = vmul.f32 %v1533, %v199
  %v1550 = vmul.f32 %v1534, %v204
  %v1551 = vmul.f32 %v1535, %v209
  %v1552 = vmul.f32 %v1536, %v214
  %v1553 = vmul.f32 %v1537, %v219
  %v1554 = vmul.f32 %v1538, %v224
  %1555 = vmatpush.bf16.msra.mxu0 %v1501
  %1556 = vmatpush.bf16.msra.mxu0 %v1500
  %1557 = vmatpush.bf16.msra.mxu0 %v1499
  %1558 = vmatpush.bf16.msra.mxu0 %v1498
  %1559 = vmatpush.bf16.msra.mxu0 %v1497
  %1560 = vmatpush.bf16.msra.mxu0 %v1496
  %1561 = vmatpush.bf16.msra.mxu0 %v1495
  %1562 = vmatpush.bf16.msra.mxu0 %v1494
  %1563 = vmatmul.bf16.gmra.mxu0 %v903
  %v1564 = vpop.f32.mrf.mxu0
  %v1565 = vadd.f32 %v1539, %v1564
  %v1566 = vpop.f32.mrf.mxu0
  %v1567 = vadd.f32 %v1540, %v1566
  %1568 = vmatmul.bf16.gmra.mxu0 %v904
  %v1569 = vpop.f32.mrf.mxu0
  %v1570 = vadd.f32 %v1541, %v1569
  %v1571 = vpop.f32.mrf.mxu0
  %v1572 = vadd.f32 %v1542, %v1571
  %1573 = vmatmul.bf16.gmra.mxu0 %v905
  %v1574 = vpop.f32.mrf.mxu0
  %v1575 = vadd.f32 %v1543, %v1574
  %v1576 = vpop.f32.mrf.mxu0
  %v1577 = vadd.f32 %v1544, %v1576
  %1578 = vmatmul.bf16.gmra.mxu0 %v906
  %v1579 = vpop.f32.mrf.mxu0
  %v1580 = vadd.f32 %v1545, %v1579
  %v1581 = vpop.f32.mrf.mxu0
  %v1582 = vadd.f32 %v1546, %v1581
  %1583 = vmatmul.bf16.gmra.mxu0 %v907
  %v1584 = vpop.f32.mrf.mxu0
  %v1585 = vadd.f32 %v1547, %v1584
  %v1586 = vpop.f32.mrf.mxu0
  %v1587 = vadd.f32 %v1548, %v1586
  %1588 = vmatmul.bf16.gmra.mxu0 %v908
  %v1589 = vpop.f32.mrf.mxu0
  %v1590 = vadd.f32 %v1549, %v1589
  %v1591 = vpop.f32.mrf.mxu0
  %v1592 = vadd.f32 %v1550, %v1591
  %1593 = vmatmul.bf16.gmra.mxu0 %v909
  %v1594 = vpop.f32.mrf.mxu0
  %v1595 = vadd.f32 %v1551, %v1594
  %v1596 = vpop.f32.mrf.mxu0
  %v1597 = vadd.f32 %v1552, %v1596
  %1598 = vmatmul.bf16.gmra.mxu0 %v910
  %v1599 = vpop.f32.mrf.mxu0
  %v1600 = vadd.f32 %v1553, %v1599
  %v1601 = vpop.f32.mrf.mxu0
  %v1602 = vadd.f32 %v1554, %v1601
  %1603 = vdwg.mxu0
  %v1604 = vmax.f32 %v1565, 0.0
  %v1605 = vmax.f32 %v1567, 0.0
  %v1606 = vmax.f32 %v1570, 0.0
  %v1607 = vmax.f32 %v1572, 0.0
  %v1608 = vmax.f32 %v1575, 0.0
  %v1609 = vmax.f32 %v1577, 0.0
  %v1610 = vmax.f32 %v1580, 0.0
  %v1611 = vmax.f32 %v1582, 0.0
  %v1612 = vmax.f32 %v1585, 0.0
  %v1613 = vmax.f32 %v1587, 0.0
  %v1614 = vmax.f32 %v1590, 0.0
  %v1615 = vmax.f32 %v1592, 0.0
  %v1616 = vmax.f32 %v1595, 0.0
  %v1617 = vmax.f32 %v1597, 0.0
  %v1618 = vmax.f32 %v1600, 0.0
  %v1619 = vmax.f32 %v1602, 0.0
  %1620 = vst [vmem:[#allocation2 + $0x18] sm:$0xff] %v1604
  %1621 = vst [vmem:[#allocation2 + $0x38] sm:$0xff] %v1605
  %1622 = vst [vmem:[#allocation2 + $0x58] sm:$0xff] %v1606
  %1623 = vst [vmem:[#allocation2 + $0x78] sm:$0xff] %v1607
  %1624 = vst [vmem:[#allocation2 + $0x98] sm:$0xff] %v1608
  %1625 = vst [vmem:[#allocation2 + $0xb8] sm:$0xff] %v1609
  %1626 = vst [vmem:[#allocation2 + $0xd8] sm:$0xff] %v1610
  %1627 = vst [vmem:[#allocation2 + $0xf8] sm:$0xff] %v1611
  %1628 = vst [vmem:[#allocation2 + $0x118] sm:$0xff] %v1612
  %1629 = vst [vmem:[#allocation2 + $0x138] sm:$0xff] %v1613
  %1630 = vst [vmem:[#allocation2 + $0x158] sm:$0xff] %v1614
  %1631 = vst [vmem:[#allocation2 + $0x178] sm:$0xff] %v1615
  %1632 = vst [vmem:[#allocation2 + $0x198] sm:$0xff] %v1616
  %1633 = vst [vmem:[#allocation2 + $0x1b8] sm:$0xff] %v1617
  %1634 = vst [vmem:[#allocation2 + $0x1d8] sm:$0xff] %v1618
  %1635 = vst [vmem:[#allocation2 + $0x1f8] sm:$0xff] %v1619
  %v1636 = vld [vmem:[#allocation2] sm:$0xff]
  %v1637 = vld [vmem:[#allocation2 + $0x8] sm:$0xff]
  %v1638 = vld [vmem:[#allocation2 + $0x10] sm:$0xff]
  %v1639 = vld [vmem:[#allocation2 + $0x18] sm:$0xff]
  %v1640 = vld [vmem:[#allocation2 + $0x20] sm:$0xff]
  %v1641 = vld [vmem:[#allocation2 + $0x28] sm:$0xff]
  %v1642 = vld [vmem:[#allocation2 + $0x30] sm:$0xff]
  %v1643 = vld [vmem:[#allocation2 + $0x38] sm:$0xff]
  %v1644 = vld [vmem:[#allocation2 + $0x40] sm:$0xff]
  %v1645 = vld [vmem:[#allocation2 + $0x48] sm:$0xff]
  %v1646 = vld [vmem:[#allocation2 + $0x50] sm:$0xff]
  %v1647 = vld [vmem:[#allocation2 + $0x58] sm:$0xff]
  %v1648 = vld [vmem:[#allocation2 + $0x60] sm:$0xff]
  %v1649 = vld [vmem:[#allocation2 + $0x68] sm:$0xff]
  %v1650 = vld [vmem:[#allocation2 + $0x70] sm:$0xff]
  %v1651 = vld [vmem:[#allocation2 + $0x78] sm:$0xff]
  %v1652 = vld [vmem:[#allocation2 + $0x80] sm:$0xff]
  %v1653 = vld [vmem:[#allocation2 + $0x88] sm:$0xff]
  %v1654 = vld [vmem:[#allocation2 + $0x90] sm:$0xff]
  %v1655 = vld [vmem:[#allocation2 + $0x98] sm:$0xff]
  %v1656 = vld [vmem:[#allocation2 + $0xa0] sm:$0xff]
  %v1657 = vld [vmem:[#allocation2 + $0xa8] sm:$0xff]
  %v1658 = vld [vmem:[#allocation2 + $0xb0] sm:$0xff]
  %v1659 = vld [vmem:[#allocation2 + $0xb8] sm:$0xff]
  %v1660 = vld [vmem:[#allocation2 + $0xc0] sm:$0xff]
  %v1661 = vld [vmem:[#allocation2 + $0xc8] sm:$0xff]
  %v1662 = vld [vmem:[#allocation2 + $0xd0] sm:$0xff]
  %v1663 = vld [vmem:[#allocation2 + $0xd8] sm:$0xff]
  %v1664 = vld [vmem:[#allocation2 + $0xe0] sm:$0xff]
  %v1665 = vld [vmem:[#allocation2 + $0xe8] sm:$0xff]
  %v1666 = vld [vmem:[#allocation2 + $0xf0] sm:$0xff]
  %v1667 = vld [vmem:[#allocation2 + $0xf8] sm:$0xff]
  %v1668 = vld [vmem:[#allocation2 + $0x100] sm:$0xff]
  %v1669 = vld [vmem:[#allocation2 + $0x108] sm:$0xff]
  %v1670 = vld [vmem:[#allocation2 + $0x110] sm:$0xff]
  %v1671 = vld [vmem:[#allocation2 + $0x118] sm:$0xff]
  %v1672 = vld [vmem:[#allocation2 + $0x120] sm:$0xff]
  %v1673 = vld [vmem:[#allocation2 + $0x128] sm:$0xff]
  %v1674 = vld [vmem:[#allocation2 + $0x130] sm:$0xff]
  %v1675 = vld [vmem:[#allocation2 + $0x138] sm:$0xff]
  %v1676 = vld [vmem:[#allocation2 + $0x140] sm:$0xff]
  %v1677 = vld [vmem:[#allocation2 + $0x148] sm:$0xff]
  %v1678 = vld [vmem:[#allocation2 + $0x150] sm:$0xff]
  %v1679 = vld [vmem:[#allocation2 + $0x158] sm:$0xff]
  %v1680 = vld [vmem:[#allocation2 + $0x160] sm:$0xff]
  %v1681 = vld [vmem:[#allocation2 + $0x168] sm:$0xff]
  %v1682 = vld [vmem:[#allocation2 + $0x170] sm:$0xff]
  %v1683 = vld [vmem:[#allocation2 + $0x178] sm:$0xff]
  %v1684 = vld [vmem:[#allocation2 + $0x180] sm:$0xff]
  %v1685 = vld [vmem:[#allocation2 + $0x188] sm:$0xff]
  %v1686 = vld [vmem:[#allocation2 + $0x190] sm:$0xff]
  %v1687 = vld [vmem:[#allocation2 + $0x198] sm:$0xff]
  %v1688 = vld [vmem:[#allocation2 + $0x1a0] sm:$0xff]
  %v1689 = vld [vmem:[#allocation2 + $0x1a8] sm:$0xff]
  %v1690 = vld [vmem:[#allocation2 + $0x1b0] sm:$0xff]
  %v1691 = vld [vmem:[#allocation2 + $0x1b8] sm:$0xff]
  %v1692 = vld [vmem:[#allocation2 + $0x1c0] sm:$0xff]
  %v1693 = vld [vmem:[#allocation2 + $0x1c8] sm:$0xff]
  %v1694 = vld [vmem:[#allocation2 + $0x1d0] sm:$0xff]
  %v1695 = vld [vmem:[#allocation2 + $0x1d8] sm:$0xff]
  %v1696 = vld [vmem:[#allocation2 + $0x1e0] sm:$0xff]
  %v1697 = vld [vmem:[#allocation2 + $0x1e8] sm:$0xff]
  %v1698 = vld [vmem:[#allocation2 + $0x1f0] sm:$0xff]
  %v1699 = vld [vmem:[#allocation2 + $0x1f8] sm:$0xff]
  %v1700 = vadd.f32 %v1636, %v1640
  %v1701 = vadd.f32 %v1700, %v1644
  %v1702 = vadd.f32 %v1701, %v1648
  %v1703 = vadd.f32 %v1702, %v1652
  %v1704 = vadd.f32 %v1703, %v1656
  %v1705 = vadd.f32 %v1704, %v1660
  %v1706 = vadd.f32 %v1705, %v1664
  %v1707 = vadd.f32 %v1706, %v1668
  %v1708 = vadd.f32 %v1707, %v1672
  %v1709 = vadd.f32 %v1708, %v1676
  %v1710 = vadd.f32 %v1709, %v1680
  %v1711 = vadd.f32 %v1710, %v1684
  %v1712 = vadd.f32 %v1711, %v1688
  %v1713 = vadd.f32 %v1712, %v1692
  %v1714 = vadd.f32 %v1713, %v1696
  %v1715 = vrot.slane %v1714, 4
  %v1716 = vadd.f32 %v1714, %v1715
  %v1717 = vrot.slane %v1716, 2
  %v1718 = vadd.f32 %v1716, %v1717
  %v1719 = vrot.slane %v1718, 1
  %v1720 = vadd.f32 %v1718, %v1719
  %v1721 = vadd.f32 %v1637, %v1641
  %v1722 = vadd.f32 %v1721, %v1645
  %v1723 = vadd.f32 %v1722, %v1649
  %v1724 = vadd.f32 %v1723, %v1653
  %v1725 = vadd.f32 %v1724, %v1657
  %v1726 = vadd.f32 %v1725, %v1661
  %v1727 = vadd.f32 %v1726, %v1665
  %v1728 = vadd.f32 %v1727, %v1669
  %v1729 = vadd.f32 %v1728, %v1673
  %v1730 = vadd.f32 %v1729, %v1677
  %v1731 = vadd.f32 %v1730, %v1681
  %v1732 = vadd.f32 %v1731, %v1685
  %v1733 = vadd.f32 %v1732, %v1689
  %v1734 = vadd.f32 %v1733, %v1693
  %v1735 = vadd.f32 %v1734, %v1697
  %v1736 = vrot.slane %v1735, 4
  %v1737 = vadd.f32 %v1735, %v1736
  %v1738 = vrot.slane %v1737, 2
  %v1739 = vadd.f32 %v1737, %v1738
  %v1740 = vrot.slane %v1739, 1
  %v1741 = vadd.f32 %v1739, %v1740
  %v1742 = vadd.f32 %v1638, %v1642
  %v1743 = vadd.f32 %v1742, %v1646
  %v1744 = vadd.f32 %v1743, %v1650
  %v1745 = vadd.f32 %v1744, %v1654
  %v1746 = vadd.f32 %v1745, %v1658
  %v1747 = vadd.f32 %v1746, %v1662
  %v1748 = vadd.f32 %v1747, %v1666
  %v1749 = vadd.f32 %v1748, %v1670
  %v1750 = vadd.f32 %v1749, %v1674
  %v1751 = vadd.f32 %v1750, %v1678
  %v1752 = vadd.f32 %v1751, %v1682
  %v1753 = vadd.f32 %v1752, %v1686
  %v1754 = vadd.f32 %v1753, %v1690
  %v1755 = vadd.f32 %v1754, %v1694
  %v1756 = vadd.f32 %v1755, %v1698
  %v1757 = vrot.slane %v1756, 4
  %v1758 = vadd.f32 %v1756, %v1757
  %v1759 = vrot.slane %v1758, 2
  %v1760 = vadd.f32 %v1758, %v1759
  %v1761 = vrot.slane %v1760, 1
  %v1762 = vadd.f32 %v1760, %v1761
  %v1763 = vadd.f32 %v1639, %v1643
  %v1764 = vadd.f32 %v1763, %v1647
  %v1765 = vadd.f32 %v1764, %v1651
  %v1766 = vadd.f32 %v1765, %v1655
  %v1767 = vadd.f32 %v1766, %v1659
  %v1768 = vadd.f32 %v1767, %v1663
  %v1769 = vadd.f32 %v1768, %v1667
  %v1770 = vadd.f32 %v1769, %v1671
  %v1771 = vadd.f32 %v1770, %v1675
  %v1772 = vadd.f32 %v1771, %v1679
  %v1773 = vadd.f32 %v1772, %v1683
  %v1774 = vadd.f32 %v1773, %v1687
  %v1775 = vadd.f32 %v1774, %v1691
  %v1776 = vadd.f32 %v1775, %v1695
  %v1777 = vadd.f32 %v1776, %v1699
  %v1778 = vrot.slane %v1777, 4
  %v1779 = vadd.f32 %v1777, %v1778
  %v1780 = vrot.slane %v1779, 2
  %v1781 = vadd.f32 %v1779, %v1780
  %v1782 = vrot.slane %v1781, 1
  %v1783 = vadd.f32 %v1781, %v1782
  %v1784 = vmul.f32 %v1720, 0.0625
  %v1785 = vmul.f32 %v1741, 0.0625
  %v1786 = vmul.f32 %v1762, 0.0625
  %v1787 = vmul.f32 %v1783, 0.0625
  %v1788 = vmul.f32 %v1636, %v1636
  %v1789 = vmul.f32 %v1637, %v1637
  %v1790 = vmul.f32 %v1638, %v1638
  %v1791 = vmul.f32 %v1639, %v1639
  %v1792 = vmul.f32 %v1640, %v1640
  %v1793 = vmul.f32 %v1641, %v1641
  %v1794 = vmul.f32 %v1642, %v1642
  %v1795 = vmul.f32 %v1643, %v1643
  %v1796 = vmul.f32 %v1644, %v1644
  %v1797 = vmul.f32 %v1645, %v1645
  %v1798 = vmul.f32 %v1646, %v1646
  %v1799 = vmul.f32 %v1647, %v1647
  %v1800 = vmul.f32 %v1648, %v1648
  %v1801 = vmul.f32 %v1649, %v1649
  %v1802 = vmul.f32 %v1650, %v1650
  %v1803 = vmul.f32 %v1651, %v1651
  %v1804 = vmul.f32 %v1652, %v1652
  %v1805 = vmul.f32 %v1653, %v1653
  %v1806 = vmul.f32 %v1654, %v1654
  %v1807 = vmul.f32 %v1655, %v1655
  %v1808 = vmul.f32 %v1656, %v1656
  %v1809 = vmul.f32 %v1657, %v1657
  %v1810 = vmul.f32 %v1658, %v1658
  %v1811 = vmul.f32 %v1659, %v1659
  %v1812 = vmul.f32 %v1660, %v1660
  %v1813 = vmul.f32 %v1661, %v1661
  %v1814 = vmul.f32 %v1662, %v1662
  %v1815 = vmul.f32 %v1663, %v1663
  %v1816 = vmul.f32 %v1664, %v1664
  %v1817 = vmul.f32 %v1665, %v1665
  %v1818 = vmul.f32 %v1666, %v1666
  %v1819 = vmul.f32 %v1667, %v1667
  %v1820 = vmul.f32 %v1668, %v1668
  %v1821 = vmul.f32 %v1669, %v1669
  %v1822 = vmul.f32 %v1670, %v1670
  %v1823 = vmul.f32 %v1671, %v1671
  %v1824 = vmul.f32 %v1672, %v1672
  %v1825 = vmul.f32 %v1673, %v1673
  %v1826 = vmul.f32 %v1674, %v1674
  %v1827 = vmul.f32 %v1675, %v1675
  %v1828 = vmul.f32 %v1676, %v1676
  %v1829 = vmul.f32 %v1677, %v1677
  %v1830 = vmul.f32 %v1678, %v1678
  %v1831 = vmul.f32 %v1679, %v1679
  %v1832 = vmul.f32 %v1680, %v1680
  %v1833 = vmul.f32 %v1681, %v1681
  %v1834 = vmul.f32 %v1682, %v1682
  %v1835 = vmul.f32 %v1683, %v1683
  %v1836 = vmul.f32 %v1684, %v1684
  %v1837 = vmul.f32 %v1685, %v1685
  %v1838 = vmul.f32 %v1686, %v1686
  %v1839 = vmul.f32 %v1687, %v1687
  %v1840 = vmul.f32 %v1688, %v1688
  %v1841 = vmul.f32 %v1689, %v1689
  %v1842 = vmul.f32 %v1690, %v1690
  %v1843 = vmul.f32 %v1691, %v1691
  %v1844 = vmul.f32 %v1692, %v1692
  %v1845 = vmul.f32 %v1693, %v1693
  %v1846 = vmul.f32 %v1694, %v1694
  %v1847 = vmul.f32 %v1695, %v1695
  %v1848 = vmul.f32 %v1696, %v1696
  %v1849 = vmul.f32 %v1697, %v1697
  %v1850 = vmul.f32 %v1698, %v1698
  %v1851 = vmul.f32 %v1699, %v1699
  %v1852 = vadd.f32 %v1788, %v1792
  %v1853 = vadd.f32 %v1852, %v1796
  %v1854 = vadd.f32 %v1853, %v1800
  %v1855 = vadd.f32 %v1854, %v1804
  %v1856 = vadd.f32 %v1855, %v1808
  %v1857 = vadd.f32 %v1856, %v1812
  %v1858 = vadd.f32 %v1857, %v1816
  %v1859 = vadd.f32 %v1858, %v1820
  %v1860 = vadd.f32 %v1859, %v1824
  %v1861 = vadd.f32 %v1860, %v1828
  %v1862 = vadd.f32 %v1861, %v1832
  %v1863 = vadd.f32 %v1862, %v1836
  %v1864 = vadd.f32 %v1863, %v1840
  %v1865 = vadd.f32 %v1864, %v1844
  %v1866 = vadd.f32 %v1865, %v1848
  %v1867 = vrot.slane %v1866, 4
  %v1868 = vadd.f32 %v1866, %v1867
  %v1869 = vrot.slane %v1868, 2
  %v1870 = vadd.f32 %v1868, %v1869
  %v1871 = vrot.slane %v1870, 1
  %v1872 = vadd.f32 %v1870, %v1871
  %v1873 = vadd.f32 %v1789, %v1793
  %v1874 = vadd.f32 %v1873, %v1797
  %v1875 = vadd.f32 %v1874, %v1801
  %v1876 = vadd.f32 %v1875, %v1805
  %v1877 = vadd.f32 %v1876, %v1809
  %v1878 = vadd.f32 %v1877, %v1813
  %v1879 = vadd.f32 %v1878, %v1817
  %v1880 = vadd.f32 %v1879, %v1821
  %v1881 = vadd.f32 %v1880, %v1825
  %v1882 = vadd.f32 %v1881, %v1829
  %v1883 = vadd.f32 %v1882, %v1833
  %v1884 = vadd.f32 %v1883, %v1837
  %v1885 = vadd.f32 %v1884, %v1841
  %v1886 = vadd.f32 %v1885, %v1845
  %v1887 = vadd.f32 %v1886, %v1849
  %v1888 = vrot.slane %v1887, 4
  %v1889 = vadd.f32 %v1887, %v1888
  %v1890 = vrot.slane %v1889, 2
  %v1891 = vadd.f32 %v1889, %v1890
  %v1892 = vrot.slane %v1891, 1
  %v1893 = vadd.f32 %v1891, %v1892
  %v1894 = vadd.f32 %v1790, %v1794
  %v1895 = vadd.f32 %v1894, %v1798
  %v1896 = vadd.f32 %v1895, %v1802
  %v1897 = vadd.f32 %v1896, %v1806
  %v1898 = vadd.f32 %v1897, %v1810
  %v1899 = vadd.f32 %v1898, %v1814
  %v1900 = vadd.f32 %v1899, %v1818
  %v1901 = vadd.f32 %v1900, %v1822
  %v1902 = vadd.f32 %v1901, %v1826
  %v1903 = vadd.f32 %v1902, %v1830
  %v1904 = vadd.f32 %v1903, %v1834
  %v1905 = vadd.f32 %v1904, %v1838
  %v1906 = vadd.f32 %v1905, %v1842
  %v1907 = vadd.f32 %v1906, %v1846
  %v1908 = vadd.f32 %v1907, %v1850
  %v1909 = vrot.slane %v1908, 4
  %v1910 = vadd.f32 %v1908, %v1909
  %v1911 = vrot.slane %v1910, 2
  %v1912 = vadd.f32 %v1910, %v1911
  %v1913 = vrot.slane %v1912, 1
  %v1914 = vadd.f32 %v1912, %v1913
  %v1915 = vadd.f32 %v1791, %v1795
  %v1916 = vadd.f32 %v1915, %v1799
  %v1917 = vadd.f32 %v1916, %v1803
  %v1918 = vadd.f32 %v1917, %v1807
  %v1919 = vadd.f32 %v1918, %v1811
  %v1920 = vadd.f32 %v1919, %v1815
  %v1921 = vadd.f32 %v1920, %v1819
  %v1922 = vadd.f32 %v1921, %v1823
  %v1923 = vadd.f32 %v1922, %v1827
  %v1924 = vadd.f32 %v1923, %v1831
  %v1925 = vadd.f32 %v1924, %v1835
  %v1926 = vadd.f32 %v1925, %v1839
  %v1927 = vadd.f32 %v1926, %v1843
  %v1928 = vadd.f32 %v1927, %v1847
  %v1929 = vadd.f32 %v1928, %v1851
  %v1930 = vrot.slane %v1929, 4
  %v1931 = vadd.f32 %v1929, %v1930
  %v1932 = vrot.slane %v1931, 2
  %v1933 = vadd.f32 %v1931, %v1932
  %v1934 = vrot.slane %v1933, 1
  %v1935 = vadd.f32 %v1933, %v1934
  %v1936 = vmul.f32 %v1872, 0.0625
  %v1937 = vmul.f32 %v1893, 0.0625
  %v1938 = vmul.f32 %v1914, 0.0625
  %v1939 = vmul.f32 %v1935, 0.0625
  %v1940 = vmul.f32 %v1784, %v1784
  %v1941 = vmul.f32 %v1785, %v1785
  %v1942 = vmul.f32 %v1786, %v1786
  %v1943 = vmul.f32 %v1787, %v1787
  %v1944 = vsub.f32 %v1936, %v1940
  %v1945 = vsub.f32 %v1937, %v1941
  %v1946 = vsub.f32 %v1938, %v1942
  %v1947 = vsub.f32 %v1939, %v1943
  %v1948 = vsub.f32 %v1636, %v1784
  %v1949 = vsub.f32 %v1637, %v1785
  %v1950 = vsub.f32 %v1638, %v1786
  %v1951 = vsub.f32 %v1639, %v1787
  %v1952 = vsub.f32 %v1640, %v1784
  %v1953 = vsub.f32 %v1641, %v1785
  %v1954 = vsub.f32 %v1642, %v1786
  %v1955 = vsub.f32 %v1643, %v1787
  %v1956 = vsub.f32 %v1644, %v1784
  %v1957 = vsub.f32 %v1645, %v1785
  %v1958 = vsub.f32 %v1646, %v1786
  %v1959 = vsub.f32 %v1647, %v1787
  %v1960 = vsub.f32 %v1648, %v1784
  %v1961 = vsub.f32 %v1649, %v1785
  %v1962 = vsub.f32 %v1650, %v1786
  %v1963 = vsub.f32 %v1651, %v1787
  %v1964 = vsub.f32 %v1652, %v1784
  %v1965 = vsub.f32 %v1653, %v1785
  %v1966 = vsub.f32 %v1654, %v1786
  %v1967 = vsub.f32 %v1655, %v1787
  %v1968 = vsub.f32 %v1656, %v1784
  %v1969 = vsub.f32 %v1657, %v1785
  %v1970 = vsub.f32 %v1658, %v1786
  %v1971 = vsub.f32 %v1659, %v1787
  %v1972 = vsub.f32 %v1660, %v1784
  %v1973 = vsub.f32 %v1661, %v1785
  %v1974 = vsub.f32 %v1662, %v1786
  %v1975 = vsub.f32 %v1663, %v1787
  %v1976 = vsub.f32 %v1664, %v1784
  %v1977 = vsub.f32 %v1665, %v1785
  %v1978 = vsub.f32 %v1666, %v1786
  %v1979 = vsub.f32 %v1667, %v1787
  %v1980 = vsub.f32 %v1668, %v1784
  %v1981 = vsub.f32 %v1669, %v1785
  %v1982 = vsub.f32 %v1670, %v1786
  %v1983 = vsub.f32 %v1671, %v1787
  %v1984 = vsub.f32 %v1672, %v1784
  %v1985 = vsub.f32 %v1673, %v1785
  %v1986 = vsub.f32 %v1674, %v1786
  %v1987 = vsub.f32 %v1675, %v1787
  %v1988 = vsub.f32 %v1676, %v1784
  %v1989 = vsub.f32 %v1677, %v1785
  %v1990 = vsub.f32 %v1678, %v1786
  %v1991 = vsub.f32 %v1679, %v1787
  %v1992 = vsub.f32 %v1680, %v1784
  %v1993 = vsub.f32 %v1681, %v1785
  %v1994 = vsub.f32 %v1682, %v1786
  %v1995 = vsub.f32 %v1683, %v1787
  %v1996 = vsub.f32 %v1684, %v1784
  %v1997 = vsub.f32 %v1685, %v1785
  %v1998 = vsub.f32 %v1686, %v1786
  %v1999 = vsub.f32 %v1687, %v1787
  %v2000 = vsub.f32 %v1688, %v1784
  %v2001 = vsub.f32 %v1689, %v1785
  %v2002 = vsub.f32 %v1690, %v1786
  %v2003 = vsub.f32 %v1691, %v1787
  %v2004 = vsub.f32 %v1692, %v1784
  %v2005 = vsub.f32 %v1693, %v1785
  %v2006 = vsub.f32 %v1694, %v1786
  %v2007 = vsub.f32 %v1695, %v1787
  %v2008 = vsub.f32 %v1696, %v1784
  %v2009 = vsub.f32 %v1697, %v1785
  %v2010 = vsub.f32 %v1698, %v1786
  %v2011 = vsub.f32 %v1699, %v1787
  %v2012 = vadd.f32 %v1944, 1e-05
  %v2013 = vadd.f32 %v1945, 1e-05
  %v2014 = vadd.f32 %v1946, 1e-05
  %v2015 = vadd.f32 %v1947, 1e-05
  %v2016 = vrsqrt.pop %v2012
  %v2017 = vmul.f32 %v2016, %v2012
  %v2018 = vmul.f32 %v2017, %v2016
  %v2019 = vmul.f32 0.5, %v2018
  %v2020 = vsub.f32 1.5, %v2019
  %v2021 = vmul.f32 %v2016, %v2020
  %vm2022 = vweird.f32 %v2012
  %vm2023 = vweird.f32 %v2016
  %vm2024 = vmor %vm2022, %vm2023
  %v2025 = vsel %vm2024, %v2016, %v2021
  %v2026 = vrsqrt.pop %v2013
  %v2027 = vmul.f32 %v2026, %v2013
  %v2028 = vmul.f32 %v2027, %v2026
  %v2029 = vmul.f32 0.5, %v2028
  %v2030 = vsub.f32 1.5, %v2029
  %v2031 = vmul.f32 %v2026, %v2030
  %vm2032 = vweird.f32 %v2013
  %vm2033 = vweird.f32 %v2026
  %vm2034 = vmor %vm2032, %vm2033
  %v2035 = vsel %vm2034, %v2026, %v2031
  %v2036 = vrsqrt.pop %v2014
  %v2037 = vmul.f32 %v2036, %v2014
  %v2038 = vmul.f32 %v2037, %v2036
  %v2039 = vmul.f32 0.5, %v2038
  %v2040 = vsub.f32 1.5, %v2039
  %v2041 = vmul.f32 %v2036, %v2040
  %vm2042 = vweird.f32 %v2014
  %vm2043 = vweird.f32 %v2036
  %vm2044 = vmor %vm2042, %vm2043
  %v2045 = vsel %vm2044, %v2036, %v2041
  %v2046 = vrsqrt.pop %v2015
  %v2047 = vmul.f32 %v2046, %v2015
  %v2048 = vmul.f32 %v2047, %v2046
  %v2049 = vmul.f32 0.5, %v2048
  %v2050 = vsub.f32 1.5, %v2049
  %v2051 = vmul.f32 %v2046, %v2050
  %vm2052 = vweird.f32 %v2015
  %vm2053 = vweird.f32 %v2046
  %vm2054 = vmor %vm2052, %vm2053
  %v2055 = vsel %vm2054, %v2046, %v2051
  %v2056 = vmul.f32 %v1948, %v2025
  %v2057 = vmul.f32 %v1949, %v2035
  %v2058 = vmul.f32 %v1950, %v2045
  %v2059 = vmul.f32 %v1951, %v2055
  %v2060 = vmul.f32 %v1952, %v2025
  %v2061 = vmul.f32 %v1953, %v2035
  %v2062 = vmul.f32 %v1954, %v2045
  %v2063 = vmul.f32 %v1955, %v2055
  %v2064 = vmul.f32 %v1956, %v2025
  %v2065 = vmul.f32 %v1957, %v2035
  %v2066 = vmul.f32 %v1958, %v2045
  %v2067 = vmul.f32 %v1959, %v2055
  %v2068 = vmul.f32 %v1960, %v2025
  %v2069 = vmul.f32 %v1961, %v2035
  %v2070 = vmul.f32 %v1962, %v2045
  %v2071 = vmul.f32 %v1963, %v2055
  %v2072 = vmul.f32 %v1964, %v2025
  %v2073 = vmul.f32 %v1965, %v2035
  %v2074 = vmul.f32 %v1966, %v2045
  %v2075 = vmul.f32 %v1967, %v2055
  %v2076 = vmul.f32 %v1968, %v2025
  %v2077 = vmul.f32 %v1969, %v2035
  %v2078 = vmul.f32 %v1970, %v2045
  %v2079 = vmul.f32 %v1971, %v2055
  %v2080 = vmul.f32 %v1972, %v2025
  %v2081 = vmul.f32 %v1973, %v2035
  %v2082 = vmul.f32 %v1974, %v2045
  %v2083 = vmul.f32 %v1975, %v2055
  %v2084 = vmul.f32 %v1976, %v2025
  %v2085 = vmul.f32 %v1977, %v2035
  %v2086 = vmul.f32 %v1978, %v2045
  %v2087 = vmul.f32 %v1979, %v2055
  %v2088 = vmul.f32 %v1980, %v2025
  %v2089 = vmul.f32 %v1981, %v2035
  %v2090 = vmul.f32 %v1982, %v2045
  %v2091 = vmul.f32 %v1983, %v2055
  %v2092 = vmul.f32 %v1984, %v2025
  %v2093 = vmul.f32 %v1985, %v2035
  %v2094 = vmul.f32 %v1986, %v2045
  %v2095 = vmul.f32 %v1987, %v2055
  %v2096 = vmul.f32 %v1988, %v2025
  %v2097 = vmul.f32 %v1989, %v2035
  %v2098 = vmul.f32 %v1990, %v2045
  %v2099 = vmul.f32 %v1991, %v2055
  %v2100 = vmul.f32 %v1992, %v2025
  %v2101 = vmul.f32 %v1993, %v2035
  %v2102 = vmul.f32 %v1994, %v2045
  %v2103 = vmul.f32 %v1995, %v2055
  %v2104 = vmul.f32 %v1996, %v2025
  %v2105 = vmul.f32 %v1997, %v2035
  %v2106 = vmul.f32 %v1998, %v2045
  %v2107 = vmul.f32 %v1999, %v2055
  %v2108 = vmul.f32 %v2000, %v2025
  %v2109 = vmul.f32 %v2001, %v2035
  %v2110 = vmul.f32 %v2002, %v2045
  %v2111 = vmul.f32 %v2003, %v2055
  %v2112 = vmul.f32 %v2004, %v2025
  %v2113 = vmul.f32 %v2005, %v2035
  %v2114 = vmul.f32 %v2006, %v2045
  %v2115 = vmul.f32 %v2007, %v2055
  %v2116 = vmul.f32 %v2008, %v2025
  %v2117 = vmul.f32 %v2009, %v2035
  %v2118 = vmul.f32 %v2010, %v2045
  %v2119 = vmul.f32 %v2011, %v2055
  %v2120 = vld [vmem:[%s11] sm:$0xf]
  %v2122 = vperm.slane %v2120, 0
  %v2123 = vperm.slane %v2120, 1
  %v2124 = vperm.slane %v2120, 2
  %v2125 = vperm.slane %v2120, 3
  %v2130 = vmul.f32 %v2056, %v2122
  %v2131 = vmul.f32 %v2057, %v2123
  %v2132 = vmul.f32 %v2058, %v2124
  %v2133 = vmul.f32 %v2059, %v2125
  %v2134 = vmul.f32 %v2060, %v2122
  %v2135 = vmul.f32 %v2061, %v2123
  %v2136 = vmul.f32 %v2062, %v2124
  %v2137 = vmul.f32 %v2063, %v2125
  %v2138 = vmul.f32 %v2064, %v2122
  %v2139 = vmul.f32 %v2065, %v2123
  %v2140 = vmul.f32 %v2066, %v2124
  %v2141 = vmul.f32 %v2067, %v2125
  %v2142 = vmul.f32 %v2068, %v2122
  %v2143 = vmul.f32 %v2069, %v2123
  %v2144 = vmul.f32 %v2070, %v2124
  %v2145 = vmul.f32 %v2071, %v2125
  %v2146 = vmul.f32 %v2072, %v2122
  %v2147 = vmul.f32 %v2073, %v2123
  %v2148 = vmul.f32 %v2074, %v2124
  %v2149 = vmul.f32 %v2075, %v2125
  %v2150 = vmul.f32 %v2076, %v2122
  %v2151 = vmul.f32 %v2077, %v2123
  %v2152 = vmul.f32 %v2078, %v2124
  %v2153 = vmul.f32 %v2079, %v2125
  %v2154 = vmul.f32 %v2080, %v2122
  %v2155 = vmul.f32 %v2081, %v2123
  %v2156 = vmul.f32 %v2082, %v2124
  %v2157 = vmul.f32 %v2083, %v2125
  %v2158 = vmul.f32 %v2084, %v2122
  %v2159 = vmul.f32 %v2085, %v2123
  %v2160 = vmul.f32 %v2086, %v2124
  %v2161 = vmul.f32 %v2087, %v2125
  %v2162 = vmul.f32 %v2088, %v2122
  %v2163 = vmul.f32 %v2089, %v2123
  %v2164 = vmul.f32 %v2090, %v2124
  %v2165 = vmul.f32 %v2091, %v2125
  %v2166 = vmul.f32 %v2092, %v2122
  %v2167 = vmul.f32 %v2093, %v2123
  %v2168 = vmul.f32 %v2094, %v2124
  %v2169 = vmul.f32 %v2095, %v2125
  %v2170 = vmul.f32 %v2096, %v2122
  %v2171 = vmul.f32 %v2097, %v2123
  %v2172 = vmul.f32 %v2098, %v2124
  %v2173 = vmul.f32 %v2099, %v2125
  %v2174 = vmul.f32 %v2100, %v2122
  %v2175 = vmul.f32 %v2101, %v2123
  %v2176 = vmul.f32 %v2102, %v2124
  %v2177 = vmul.f32 %v2103, %v2125
  %v2178 = vmul.f32 %v2104, %v2122
  %v2179 = vmul.f32 %v2105, %v2123
  %v2180 = vmul.f32 %v2106, %v2124
  %v2181 = vmul.f32 %v2107, %v2125
  %v2182 = vmul.f32 %v2108, %v2122
  %v2183 = vmul.f32 %v2109, %v2123
  %v2184 = vmul.f32 %v2110, %v2124
  %v2185 = vmul.f32 %v2111, %v2125
  %v2186 = vmul.f32 %v2112, %v2122
  %v2187 = vmul.f32 %v2113, %v2123
  %v2188 = vmul.f32 %v2114, %v2124
  %v2189 = vmul.f32 %v2115, %v2125
  %v2190 = vmul.f32 %v2116, %v2122
  %v2191 = vmul.f32 %v2117, %v2123
  %v2192 = vmul.f32 %v2118, %v2124
  %v2193 = vmul.f32 %v2119, %v2125
  %v2194 = vld [vmem:[%s12] sm:$0xf]
  %v2196 = vperm.slane %v2194, 0
  %v2197 = vperm.slane %v2194, 1
  %v2198 = vperm.slane %v2194, 2
  %v2199 = vperm.slane %v2194, 3
  %v2204 = vadd.f32 %v2130, %v2196
  %v2205 = vadd.f32 %v2131, %v2197
  %v2206 = vadd.f32 %v2132, %v2198
  %v2207 = vadd.f32 %v2133, %v2199
  %v2208 = vadd.f32 %v2134, %v2196
  %v2209 = vadd.f32 %v2135, %v2197
  %v2210 = vadd.f32 %v2136, %v2198
  %v2211 = vadd.f32 %v2137, %v2199
  %v2212 = vadd.f32 %v2138, %v2196
  %v2213 = vadd.f32 %v2139, %v2197
  %v2214 = vadd.f32 %v2140, %v2198
  %v2215 = vadd.f32 %v2141, %v2199
  %v2216 = vadd.f32 %v2142, %v2196
  %v2217 = vadd.f32 %v2143, %v2197
  %v2218 = vadd.f32 %v2144, %v2198
  %v2219 = vadd.f32 %v2145, %v2199
  %v2220 = vadd.f32 %v2146, %v2196
  %v2221 = vadd.f32 %v2147, %v2197
  %v2222 = vadd.f32 %v2148, %v2198
  %v2223 = vadd.f32 %v2149, %v2199
  %v2224 = vadd.f32 %v2150, %v2196
  %v2225 = vadd.f32 %v2151, %v2197
  %v2226 = vadd.f32 %v2152, %v2198
  %v2227 = vadd.f32 %v2153, %v2199
  %v2228 = vadd.f32 %v2154, %v2196
  %v2229 = vadd.f32 %v2155, %v2197
  %v2230 = vadd.f32 %v2156, %v2198
  %v2231 = vadd.f32 %v2157, %v2199
  %v2232 = vadd.f32 %v2158, %v2196
  %v2233 = vadd.f32 %v2159, %v2197
  %v2234 = vadd.f32 %v2160, %v2198
  %v2235 = vadd.f32 %v2161, %v2199
  %v2236 = vadd.f32 %v2162, %v2196
  %v2237 = vadd.f32 %v2163, %v2197
  %v2238 = vadd.f32 %v2164, %v2198
  %v2239 = vadd.f32 %v2165, %v2199
  %v2240 = vadd.f32 %v2166, %v2196
  %v2241 = vadd.f32 %v2167, %v2197
  %v2242 = vadd.f32 %v2168, %v2198
  %v2243 = vadd.f32 %v2169, %v2199
  %v2244 = vadd.f32 %v2170, %v2196
  %v2245 = vadd.f32 %v2171, %v2197
  %v2246 = vadd.f32 %v2172, %v2198
  %v2247 = vadd.f32 %v2173, %v2199
  %v2248 = vadd.f32 %v2174, %v2196
  %v2249 = vadd.f32 %v2175, %v2197
  %v2250 = vadd.f32 %v2176, %v2198
  %v2251 = vadd.f32 %v2177, %v2199
  %v2252 = vadd.f32 %v2178, %v2196
  %v2253 = vadd.f32 %v2179, %v2197
  %v2254 = vadd.f32 %v2180, %v2198
  %v2255 = vadd.f32 %v2181, %v2199
  %v2256 = vadd.f32 %v2182, %v2196
  %v2257 = vadd.f32 %v2183, %v2197
  %v2258 = vadd.f32 %v2184, %v2198
  %v2259 = vadd.f32 %v2185, %v2199
  %v2260 = vadd.f32 %v2186, %v2196
  %v2261 = vadd.f32 %v2187, %v2197
  %v2262 = vadd.f32 %v2188, %v2198
  %v2263 = vadd.f32 %v2189, %v2199
  %v2264 = vadd.f32 %v2190, %v2196
  %v2265 = vadd.f32 %v2191, %v2197
  %v2266 = vadd.f32 %v2192, %v2198
  %v2267 = vadd.f32 %v2193, %v2199
  %v2268 = vld [vmem:[%s13] sm:$0xff]
  %v2269 = vld [vmem:[%s13 + $0x8] sm:$0xff]
  %v2270 = vld [vmem:[%s13 + $0x10] sm:$0xff]
  %v2271 = vld [vmem:[%s13 + $0x18] sm:$0xff]
  %v2272 = vld [vmem:[%s13 + $0x20] sm:$0xff]
  %v2273 = vld [vmem:[%s13 + $0x28] sm:$0xff]
  %v2274 = vld [vmem:[%s13 + $0x30] sm:$0xff]
  %v2275 = vld [vmem:[%s13 + $0x38] sm:$0xff]
  %v2276 = vld [vmem:[%s13 + $0x40] sm:$0xff]
  %v2277 = vld [vmem:[%s13 + $0x48] sm:$0xff]
  %v2278 = vld [vmem:[%s13 + $0x50] sm:$0xff]
  %v2279 = vld [vmem:[%s13 + $0x58] sm:$0xff]
  %v2280 = vld [vmem:[%s13 + $0x60] sm:$0xff]
  %v2281 = vld [vmem:[%s13 + $0x68] sm:$0xff]
  %v2282 = vld [vmem:[%s13 + $0x70] sm:$0xff]
  %v2283 = vld [vmem:[%s13 + $0x78] sm:$0xff]
  %v2284 = vld [vmem:[%s13 + $0x80] sm:$0xff]
  %v2285 = vld [vmem:[%s13 + $0x88] sm:$0xff]
  %v2286 = vld [vmem:[%s13 + $0x90] sm:$0xff]
  %v2287 = vld [vmem:[%s13 + $0x98] sm:$0xff]
  %v2288 = vld [vmem:[%s13 + $0xa0] sm:$0xff]
  %v2289 = vld [vmem:[%s13 + $0xa8] sm:$0xff]
  %v2290 = vld [vmem:[%s13 + $0xb0] sm:$0xff]
  %v2291 = vld [vmem:[%s13 + $0xb8] sm:$0xff]
  %v2292 = vld [vmem:[%s13 + $0xc0] sm:$0xff]
  %v2293 = vld [vmem:[%s13 + $0xc8] sm:$0xff]
  %v2294 = vld [vmem:[%s13 + $0xd0] sm:$0xff]
  %v2295 = vld [vmem:[%s13 + $0xd8] sm:$0xff]
  %v2296 = vld [vmem:[%s13 + $0xe0] sm:$0xff]
  %v2297 = vld [vmem:[%s13 + $0xe8] sm:$0xff]
  %v2298 = vld [vmem:[%s13 + $0xf0] sm:$0xff]
  %v2299 = vld [vmem:[%s13 + $0xf8] sm:$0xff]
  %v2300 = vld [vmem:[%s13 + $0x100] sm:$0xff]
  %v2301 = vld [vmem:[%s13 + $0x108] sm:$0xff]
  %v2302 = vld [vmem:[%s13 + $0x110] sm:$0xff]
  %v2303 = vld [vmem:[%s13 + $0x118] sm:$0xff]
  %v2304 = vld [vmem:[%s13 + $0x120] sm:$0xff]
  %v2305 = vld [vmem:[%s13 + $0x128] sm:$0xff]
  %v2306 = vld [vmem:[%s13 + $0x130] sm:$0xff]
  %v2307 = vld [vmem:[%s13 + $0x138] sm:$0xff]
  %v2308 = vld [vmem:[%s13 + $0x140] sm:$0xff]
  %v2309 = vld [vmem:[%s13 + $0x148] sm:$0xff]
  %v2310 = vld [vmem:[%s13 + $0x150] sm:$0xff]
  %v2311 = vld [vmem:[%s13 + $0x158] sm:$0xff]
  %v2312 = vld [vmem:[%s13 + $0x160] sm:$0xff]
  %v2313 = vld [vmem:[%s13 + $0x168] sm:$0xff]
  %v2314 = vld [vmem:[%s13 + $0x170] sm:$0xff]
  %v2315 = vld [vmem:[%s13 + $0x178] sm:$0xff]
  %v2316 = vld [vmem:[%s13 + $0x180] sm:$0xff]
  %v2317 = vld [vmem:[%s13 + $0x188] sm:$0xff]
  %v2318 = vld [vmem:[%s13 + $0x190] sm:$0xff]
  %v2319 = vld [vmem:[%s13 + $0x198] sm:$0xff]
  %v2320 = vld [vmem:[%s13 + $0x1a0] sm:$0xff]
  %v2321 = vld [vmem:[%s13 + $0x1a8] sm:$0xff]
  %v2322 = vld [vmem:[%s13 + $0x1b0] sm:$0xff]
  %v2323 = vld [vmem:[%s13 + $0x1b8] sm:$0xff]
  %v2324 = vld [vmem:[%s13 + $0x1c0] sm:$0xff]
  %v2325 = vld [vmem:[%s13 + $0x1c8] sm:$0xff]
  %v2326 = vld [vmem:[%s13 + $0x1d0] sm:$0xff]
  %v2327 = vld [vmem:[%s13 + $0x1d8] sm:$0xff]
  %v2328 = vld [vmem:[%s13 + $0x1e0] sm:$0xff]
  %v2329 = vld [vmem:[%s13 + $0x1e8] sm:$0xff]
  %v2330 = vld [vmem:[%s13 + $0x1f0] sm:$0xff]
  %v2331 = vld [vmem:[%s13 + $0x1f8] sm:$0xff]
  %v2332 = vld [vmem:[%s14] sm:$0x1]
  %v2334 = vperm.slane %v2332, 0
  %2336 = vmatpush.msra.mxu0 %v2283
  %2337 = vmatpush.msra.mxu0 %v2282
  %2338 = vmatpush.msra.mxu0 %v2281
  %2339 = vmatpush.msra.mxu0 %v2280
  %2340 = vmatpush.msra.mxu0 %v2279
  %2341 = vmatpush.msra.mxu0 %v2278
  %2342 = vmatpush.msra.mxu0 %v2277
  %2343 = vmatpush.msra.mxu0 %v2276
  %2344 = vmatpush.msra.mxu0 %v2275
  %2345 = vmatpush.msra.mxu0 %v2274
  %2346 = vmatpush.msra.mxu0 %v2273
  %2347 = vmatpush.msra.mxu0 %v2272
  %2348 = vmatpush.msra.mxu0 %v2271
  %2349 = vmatpush.msra.mxu0 %v2270
  %2350 = vmatpush.msra.mxu0 %v2269
  %2351 = vmatpush.msra.mxu0 %v2268
  %2352 = vmatmul.f32.gmra.mxu0 %v2204
  %v2353 = vpop.f32.mrf.mxu0
  %v2354 = vadd.f32 %v2334, %v2353
  %2355 = vmatmul.f32.gmra.mxu0 %v2208
  %v2356 = vpop.f32.mrf.mxu0
  %v2357 = vadd.f32 %v2334, %v2356
  %2358 = vmatmul.f32.gmra.mxu0 %v2212
  %v2359 = vpop.f32.mrf.mxu0
  %v2360 = vadd.f32 %v2334, %v2359
  %2361 = vmatmul.f32.gmra.mxu0 %v2216
  %v2362 = vpop.f32.mrf.mxu0
  %v2363 = vadd.f32 %v2334, %v2362
  %2364 = vmatmul.f32.gmra.mxu0 %v2220
  %v2365 = vpop.f32.mrf.mxu0
  %v2366 = vadd.f32 %v2334, %v2365
  %2367 = vmatmul.f32.gmra.mxu0 %v2224
  %v2368 = vpop.f32.mrf.mxu0
  %v2369 = vadd.f32 %v2334, %v2368
  %2370 = vmatmul.f32.gmra.mxu0 %v2228
  %v2371 = vpop.f32.mrf.mxu0
  %v2372 = vadd.f32 %v2334, %v2371
  %2373 = vmatmul.f32.gmra.mxu0 %v2232
  %v2374 = vpop.f32.mrf.mxu0
  %v2375 = vadd.f32 %v2334, %v2374
  %2376 = vmatmul.f32.gmra.mxu0 %v2236
  %v2377 = vpop.f32.mrf.mxu0
  %v2378 = vadd.f32 %v2334, %v2377
  %2379 = vmatmul.f32.gmra.mxu0 %v2240
  %v2380 = vpop.f32.mrf.mxu0
  %v2381 = vadd.f32 %v2334, %v2380
  %2382 = vmatmul.f32.gmra.mxu0 %v2244
  %v2383 = vpop.f32.mrf.mxu0
  %v2384 = vadd.f32 %v2334, %v2383
  %2385 = vmatmul.f32.gmra.mxu0 %v2248
  %v2386 = vpop.f32.mrf.mxu0
  %v2387 = vadd.f32 %v2334, %v2386
  %2388 = vmatmul.f32.gmra.mxu0 %v2252
  %v2389 = vpop.f32.mrf.mxu0
  %v2390 = vadd.f32 %v2334, %v2389
  %2391 = vmatmul.f32.gmra.mxu0 %v2256
  %v2392 = vpop.f32.mrf.mxu0
  %v2393 = vadd.f32 %v2334, %v2392
  %2394 = vmatmul.f32.gmra.mxu0 %v2260
  %v2395 = vpop.f32.mrf.mxu0
  %v2396 = vadd.f32 %v2334, %v2395
  %2397 = vmatmul.f32.gmra.mxu0 %v2264
  %v2398 = vpop.f32.mrf.mxu0
  %v2399 = vadd.f32 %v2334, %v2398
  %2400 = vdwg.mxu0
  %2401 = vmatpush.msra.mxu0 %v2299
  %2402 = vmatpush.msra.mxu0 %v2298
  %2403 = vmatpush.msra.mxu0 %v2297
  %2404 = vmatpush.msra.mxu0 %v2296
  %2405 = vmatpush.msra.mxu0 %v2295
  %2406 = vmatpush.msra.mxu0 %v2294
  %2407 = vmatpush.msra.mxu0 %v2293
  %2408 = vmatpush.msra.mxu0 %v2292
  %2409 = vmatpush.msra.mxu0 %v2291
  %2410 = vmatpush.msra.mxu0 %v2290
  %2411 = vmatpush.msra.mxu0 %v2289
  %2412 = vmatpush.msra.mxu0 %v2288
  %2413 = vmatpush.msra.mxu0 %v2287
  %2414 = vmatpush.msra.mxu0 %v2286
  %2415 = vmatpush.msra.mxu0 %v2285
  %2416 = vmatpush.msra.mxu0 %v2284
  %2417 = vmatmul.f32.gmra.mxu0 %v2205
  %v2418 = vpop.f32.mrf.mxu0
  %v2419 = vadd.f32 %v2354, %v2418
  %2420 = vmatmul.f32.gmra.mxu0 %v2209
  %v2421 = vpop.f32.mrf.mxu0
  %v2422 = vadd.f32 %v2357, %v2421
  %2423 = vmatmul.f32.gmra.mxu0 %v2213
  %v2424 = vpop.f32.mrf.mxu0
  %v2425 = vadd.f32 %v2360, %v2424
  %2426 = vmatmul.f32.gmra.mxu0 %v2217
  %v2427 = vpop.f32.mrf.mxu0
  %v2428 = vadd.f32 %v2363, %v2427
  %2429 = vmatmul.f32.gmra.mxu0 %v2221
  %v2430 = vpop.f32.mrf.mxu0
  %v2431 = vadd.f32 %v2366, %v2430
  %2432 = vmatmul.f32.gmra.mxu0 %v2225
  %v2433 = vpop.f32.mrf.mxu0
  %v2434 = vadd.f32 %v2369, %v2433
  %2435 = vmatmul.f32.gmra.mxu0 %v2229
  %v2436 = vpop.f32.mrf.mxu0
  %v2437 = vadd.f32 %v2372, %v2436
  %2438 = vmatmul.f32.gmra.mxu0 %v2233
  %v2439 = vpop.f32.mrf.mxu0
  %v2440 = vadd.f32 %v2375, %v2439
  %2441 = vmatmul.f32.gmra.mxu0 %v2237
  %v2442 = vpop.f32.mrf.mxu0
  %v2443 = vadd.f32 %v2378, %v2442
  %2444 = vmatmul.f32.gmra.mxu0 %v2241
  %v2445 = vpop.f32.mrf.mxu0
  %v2446 = vadd.f32 %v2381, %v2445
  %2447 = vmatmul.f32.gmra.mxu0 %v2245
  %v2448 = vpop.f32.mrf.mxu0
  %v2449 = vadd.f32 %v2384, %v2448
  %2450 = vmatmul.f32.gmra.mxu0 %v2249
  %v2451 = vpop.f32.mrf.mxu0
  %v2452 = vadd.f32 %v2387, %v2451
  %2453 = vmatmul.f32.gmra.mxu0 %v2253
  %v2454 = vpop.f32.mrf.mxu0
  %v2455 = vadd.f32 %v2390, %v2454
  %2456 = vmatmul.f32.gmra.mxu0 %v2257
  %v2457 = vpop.f32.mrf.mxu0
  %v2458 = vadd.f32 %v2393, %v2457
  %2459 = vmatmul.f32.gmra.mxu0 %v2261
  %v2460 = vpop.f32.mrf.mxu0
  %v2461 = vadd.f32 %v2396, %v2460
  %2462 = vmatmul.f32.gmra.mxu0 %v2265
  %v2463 = vpop.f32.mrf.mxu0
  %v2464 = vadd.f32 %v2399, %v2463
  %2465 = vdwg.mxu0
  %2466 = vmatpush.msra.mxu0 %v2315
  %2467 = vmatpush.msra.mxu0 %v2314
  %2468 = vmatpush.msra.mxu0 %v2313
  %2469 = vmatpush.msra.mxu0 %v2312
  %2470 = vmatpush.msra.mxu0 %v2311
  %2471 = vmatpush.msra.mxu0 %v2310
  %2472 = vmatpush.msra.mxu0 %v2309
  %2473 = vmatpush.msra.mxu0 %v2308
  %2474 = vmatpush.msra.mxu0 %v2307
  %2475 = vmatpush.msra.mxu0 %v2306
  %2476 = vmatpush.msra.mxu0 %v2305
  %2477 = vmatpush.msra.mxu0 %v2304
  %2478 = vmatpush.msra.mxu0 %v2303
  %2479 = vmatpush.msra.mxu0 %v2302
  %2480 = vmatpush.msra.mxu0 %v2301
  %2481 = vmatpush.msra.mxu0 %v2300
  %2482 = vmatmul.f32.gmra.mxu0 %v2206
  %v2483 = vpop.f32.mrf.mxu0
  %v2484 = vadd.f32 %v2419, %v2483
  %2485 = vmatmul.f32.gmra.mxu0 %v2210
  %v2486 = vpop.f32.mrf.mxu0
  %v2487 = vadd.f32 %v2422, %v2486
  %2488 = vmatmul.f32.gmra.mxu0 %v2214
  %v2489 = vpop.f32.mrf.mxu0
  %v2490 = vadd.f32 %v2425, %v2489
  %2491 = vmatmul.f32.gmra.mxu0 %v2218
  %v2492 = vpop.f32.mrf.mxu0
  %v2493 = vadd.f32 %v2428, %v2492
  %2494 = vmatmul.f32.gmra.mxu0 %v2222
  %v2495 = vpop.f32.mrf.mxu0
  %v2496 = vadd.f32 %v2431, %v2495
  %2497 = vmatmul.f32.gmra.mxu0 %v2226
  %v2498 = vpop.f32.mrf.mxu0
  %v2499 = vadd.f32 %v2434, %v2498
  %2500 = vmatmul.f32.gmra.mxu0 %v2230
  %v2501 = vpop.f32.mrf.mxu0
  %v2502 = vadd.f32 %v2437, %v2501
  %2503 = vmatmul.f32.gmra.mxu0 %v2234
  %v2504 = vpop.f32.mrf.mxu0
  %v2505 = vadd.f32 %v2440, %v2504
  %2506 = vmatmul.f32.gmra.mxu0 %v2238
  %v2507 = vpop.f32.mrf.mxu0
  %v2508 = vadd.f32 %v2443, %v2507
  %2509 = vmatmul.f32.gmra.mxu0 %v2242
  %v2510 = vpop.f32.mrf.mxu0
  %v2511 = vadd.f32 %v2446, %v2510
  %2512 = vmatmul.f32.gmra.mxu0 %v2246
  %v2513 = vpop.f32.mrf.mxu0
  %v2514 = vadd.f32 %v2449, %v2513
  %2515 = vmatmul.f32.gmra.mxu0 %v2250
  %v2516 = vpop.f32.mrf.mxu0
  %v2517 = vadd.f32 %v2452, %v2516
  %2518 = vmatmul.f32.gmra.mxu0 %v2254
  %v2519 = vpop.f32.mrf.mxu0
  %v2520 = vadd.f32 %v2455, %v2519
  %2521 = vmatmul.f32.gmra.mxu0 %v2258
  %v2522 = vpop.f32.mrf.mxu0
  %v2523 = vadd.f32 %v2458, %v2522
  %2524 = vmatmul.f32.gmra.mxu0 %v2262
  %v2525 = vpop.f32.mrf.mxu0
  %v2526 = vadd.f32 %v2461, %v2525
  %2527 = vmatmul.f32.gmra.mxu0 %v2266
  %v2528 = vpop.f32.mrf.mxu0
  %v2529 = vadd.f32 %v2464, %v2528
  %2530 = vdwg.mxu0
  %2531 = vmatpush.msra.mxu0 %v2331
  %2532 = vmatpush.msra.mxu0 %v2330
  %2533 = vmatpush.msra.mxu0 %v2329
  %2534 = vmatpush.msra.mxu0 %v2328
  %2535 = vmatpush.msra.mxu0 %v2327
  %2536 = vmatpush.msra.mxu0 %v2326
  %2537 = vmatpush.msra.mxu0 %v2325
  %2538 = vmatpush.msra.mxu0 %v2324
  %2539 = vmatpush.msra.mxu0 %v2323
  %2540 = vmatpush.msra.mxu0 %v2322
  %2541 = vmatpush.msra.mxu0 %v2321
  %2542 = vmatpush.msra.mxu0 %v2320
  %2543 = vmatpush.msra.mxu0 %v2319
  %2544 = vmatpush.msra.mxu0 %v2318
  %2545 = vmatpush.msra.mxu0 %v2317
  %2546 = vmatpush.msra.mxu0 %v2316
  %2547 = vmatmul.f32.gmra.mxu0 %v2207
  %v2548 = vpop.f32.mrf.mxu0
  %v2549 = vadd.f32 %v2484, %v2548
  %2550 = vmatmul.f32.gmra.mxu0 %v2211
  %v2551 = vpop.f32.mrf.mxu0
  %v2552 = vadd.f32 %v2487, %v2551
  %2553 = vmatmul.f32.gmra.mxu0 %v2215
  %v2554 = vpop.f32.mrf.mxu0
  %v2555 = vadd.f32 %v2490, %v2554
  %2556 = vmatmul.f32.gmra.mxu0 %v2219
  %v2557 = vpop.f32.mrf.mxu0
  %v2558 = vadd.f32 %v2493, %v2557
  %2559 = vmatmul.f32.gmra.mxu0 %v2223
  %v2560 = vpop.f32.mrf.mxu0
  %v2561 = vadd.f32 %v2496, %v2560
  %2562 = vmatmul.f32.gmra.mxu0 %v2227
  %v2563 = vpop.f32.mrf.mxu0
  %v2564 = vadd.f32 %v2499, %v2563
  %2565 = vmatmul.f32.gmra.mxu0 %v2231
  %v2566 = vpop.f32.mrf.mxu0
  %v2567 = vadd.f32 %v2502, %v2566
  %2568 = vmatmul.f32.gmra.mxu0 %v2235
  %v2569 = vpop.f32.mrf.mxu0
  %v2570 = vadd.f32 %v2505, %v2569
  %2571 = vmatmul.f32.gmra.mxu0 %v2239
  %v2572 = vpop.f32.mrf.mxu0
  %v2573 = vadd.f32 %v2508, %v2572
  %2574 = vmatmul.f32.gmra.mxu0 %v2243
  %v2575 = vpop.f32.mrf.mxu0
  %v2576 = vadd.f32 %v2511, %v2575
  %2577 = vmatmul.f32.gmra.mxu0 %v2247
  %v2578 = vpop.f32.mrf.mxu0
  %v2579 = vadd.f32 %v2514, %v2578
  %2580 = vmatmul.f32.gmra.mxu0 %v2251
  %v2581 = vpop.f32.mrf.mxu0
  %v2582 = vadd.f32 %v2517, %v2581
  %2583 = vmatmul.f32.gmra.mxu0 %v2255
  %v2584 = vpop.f32.mrf.mxu0
  %v2585 = vadd.f32 %v2520, %v2584
  %2586 = vmatmul.f32.gmra.mxu0 %v2259
  %v2587 = vpop.f32.mrf.mxu0
  %v2588 = vadd.f32 %v2523, %v2587
  %2589 = vmatmul.f32.gmra.mxu0 %v2263
  %v2590 = vpop.f32.mrf.mxu0
  %v2591 = vadd.f32 %v2526, %v2590
  %2592 = vmatmul.f32.gmra.mxu0 %v2267
  %v2593 = vpop.f32.mrf.mxu0
  %v2594 = vadd.f32 %v2529, %v2593
  %2595 = vdwg.mxu0
  %2596 = vst [vmem:[%s15] sm:$0xff] %v2549
  %2597 = vst [vmem:[%s15 + $0x8] sm:$0xff] %v2552
  %2598 = vst [vmem:[%s15 + $0x10] sm:$0xff] %v2555
  %2599 = vst [vmem:[%s15 + $0x18] sm:$0xff] %v2558
  %2600 = vst [vmem:[%s15 + $0x20] sm:$0xff] %v2561
  %2601 = vst [vmem:[%s15 + $0x28] sm:$0xff] %v2564
  %2602 = vst [vmem:[%s15 + $0x30] sm:$0xff] %v2567
  %2603 = vst [vmem:[%s15 + $0x38] sm:$0xff] %v2570
  %2604 = vst [vmem:[%s15 + $0x40] sm:$0xff] %v2573
  %2605 = vst [vmem:[%s15 + $0x48] sm:$0xff] %v2576
  %2606 = vst [vmem:[%s15 + $0x50] sm:$0xff] %v2579
  %2607 = vst [vmem:[%s15 + $0x58] sm:$0xff] %v2582
  %2608 = vst [vmem:[%s15 + $0x60] sm:$0xff] %v2585
  %2609 = vst [vmem:[%s15 + $0x68] sm:$0xff] %v2588
  %2610 = vst [vmem:[%s15 + $0x70] sm:$0xff] %v2591
  %2611 = vst [vmem:[%s15 + $0x78] sm:$0xff] %v2594
  // Predicated region
  $region62: #{structure_extractor_forward.1} parent=0 // pred_check
    _
  $region63: #{structure_extractor_forward.1} parent=0 // pred_check_branch
    %2613 = sbr.rel (0) target = $region65
  $region64: #{structure_extractor_forward.1} parent=0 // pred_region
    _
  $region65: #{structure_extractor_forward.1} parent=0 // pred_fallthru
    _
  // Predicated region
  $region66: #{structure_extractor_forward.1} parent=0 // pred_check
    _
  $region67: #{structure_extractor_forward.1} parent=0 // pred_check_branch
    %2615 = sbr.rel (0) target = $region69
  $region68: #{structure_extractor_forward.1} parent=0 // pred_region
    _
  $region69: #{structure_extractor_forward.1} parent=0 // pred_fallthru
    _

</llo_original>
